<compile_context>
chip_gen: v7x
topology: tpu7x:2x2x1
jax: 0.10.0
libtpu: 0.0.40
codegen_flags: <defaults>
</compile_context>

<pallas_src>
import functools
import math

import jax
import jax.numpy as jnp
from jax.experimental import pallas as pl
from jax.experimental.pallas import tpu as pltpu


def _mha_kernel(q_ref, k_ref, v_ref,
                wq_ref, wk_ref, wv_ref, wo_ref,
                bq_ref, bk_ref, bv_ref, bo_ref,
                o_ref,
                kh_scr, vh_scr,
                *, num_heads, head_dim, approx_recip):
    H, Dh = num_heads, head_dim
    E = H * Dh
    TQ = q_ref.shape[1]
    S = k_ref.shape[1]

    # --- K/V projection + head split: once per batch row (qi == 0 only). ---
    # Scratch persists across the (arbitrary) qi axis, so later query tiles
    # reuse the bf16 (H, S, Dh) tensors instead of redoing two ExE GEMMs and
    # two S-sized XLU relayouts per tile.
    @pl.when(pl.program_id(1) == 0)
    def _project_kv():
        k = k_ref[0]                                                  # (S, E) bf16
        v = v_ref[0]                                                  # (S, E) bf16
        K = jnp.dot(k, wk_ref[...], preferred_element_type=jnp.float32) + bk_ref[...]
        V = jnp.dot(v, wv_ref[...], preferred_element_type=jnp.float32) + bv_ref[...]
        kh_scr[...] = jnp.transpose(K.reshape(S, H, Dh), (1, 0, 2)).astype(jnp.bfloat16)
        vh_scr[...] = jnp.transpose(V.reshape(S, H, Dh), (1, 0, 2)).astype(jnp.bfloat16)

    # --- per query tile ---
    q = q_ref[0]                                                      # (TQ, E) bf16
    Q = jnp.dot(q, wq_ref[...], preferred_element_type=jnp.float32) + bq_ref[...]
    # Only this TQ-sized relayout remains per tile (S-sized ones are hoisted).
    Qh = jnp.transpose(Q.reshape(TQ, H, Dh), (1, 0, 2)).astype(jnp.bfloat16)   # (H,TQ,Dh)

    scale = 1.0 / math.sqrt(Dh)
    scores = jnp.einsum('hqd,hkd->hqk', Qh, kh_scr[...],
                        preferred_element_type=jnp.float32) * scale            # (H,TQ,S)

    # TODO(synk): optional `mask` argument of the PyTorch forward (mask == 0 ->
    # -inf before softmax) is not implemented; this kernel is the mask=None path.

    # Numerically stable softmax; elementwise math kept in f32 (v5e-safe).
    scores = scores - jnp.max(scores, axis=-1, keepdims=True)
    e = jnp.exp(scores)
    denom = jnp.sum(e, axis=-1, keepdims=True)
    if approx_recip:
        weights = (e * pl.reciprocal(denom, approx=True)).astype(jnp.bfloat16)
    else:
        weights = (e / denom).astype(jnp.bfloat16)

    ctx = jnp.einsum('hqk,hkd->hqd', weights, vh_scr[...],
                     preferred_element_type=jnp.float32)                       # (H,TQ,Dh)
    ctx = jnp.transpose(ctx, (1, 0, 2)).reshape(TQ, E).astype(jnp.bfloat16)    # (TQ, E)

    y = jnp.dot(ctx, wo_ref[...], preferred_element_type=jnp.float32) + bo_ref[...]
    o_ref[0] = y.astype(o_ref.dtype)


def _vmem_limit_bytes():
    # Generation-aware: ~3/4 of physical VMEM (v7x has only 64 MiB/TC), capped.
    try:
        cap = getattr(pltpu.get_tpu_info(), "vmem_capacity_bytes", None)
        if cap:
            return int(min(cap * 3 // 4, 100 * 1024 * 1024))
    except Exception:
        pass
    return 64 * 1024 * 1024


def multi_head_attention(query, key, value, params, *, num_heads,
                         tq=None, approx_recip=True):
    """query: [B, Sq, E]; key/value: [B, S, E] (float32).  Returns [B, Sq, E]."""
    B, Sq, E = query.shape
    _, S, _ = key.shape
    assert value.shape == key.shape
    assert E % num_heads == 0
    head_dim = E // num_heads

    wq, bq, wk, bk, wv, bv, wo, bo = params
    # bf16 matmul operands (weights AND activations): halves HBM/VMEM traffic.
    # f32 accumulation + f32 bias add + f32 softmax preserve numerics.
    wq_b, wk_b, wv_b, wo_b = (w.astype(jnp.bfloat16) for w in (wq, wk, wv, wo))
    bq2, bk2, bv2, bo2 = (x.reshape(1, E).astype(jnp.float32) for x in (bq, bk, bv, bo))
    q_b = query.astype(jnp.bfloat16)
    k_b = key.astype(jnp.bfloat16)
    v_b = value.astype(jnp.bfloat16)

    # Query-tile size: 256 amortizes MXU fill / per-step overhead on v6e/v7x;
    # 128 otherwise; full Sq for tiny sequences.  Non-multiple Sq is padded so
    # blocks stay aligned and the grid stays deep (padded queries are trimmed).
    if tq is None:
        if Sq <= 128:
            tq = Sq
        else:
            tq = 256 if Sq % 256 == 0 else 128
    sq_pad = ((Sq + tq - 1) // tq) * tq
    if sq_pad != Sq:
        q_b = jnp.pad(q_b, ((0, 0), (0, sq_pad - Sq), (0, 0)))
    n_q = sq_pad // tq

    kernel = functools.partial(_mha_kernel, num_heads=num_heads,
                               head_dim=head_dim, approx_recip=approx_recip)

    q_spec = pl.BlockSpec((1, tq, E), lambda b, qi: (b, qi, 0))
    o_spec = pl.BlockSpec((1, tq, E), lambda b, qi: (b, qi, 0))
    kv_spec = pl.BlockSpec((1, S, E), lambda b, qi: (b, 0, 0))   # re-fetched only when b changes
    mat_spec = pl.BlockSpec((E, E), lambda b, qi: (0, 0))        # constant block: DMA'd once
    vec_spec = pl.BlockSpec((1, E), lambda b, qi: (0, 0))

    # Cost model reflects cached K/V projections (once per batch row).
    flops = (2 * B * sq_pad * E * E                      # Q projection
             + 4 * B * S * E * E                         # K and V projections (cached)
             + 2 * B * sq_pad * E * E                    # output projection
             + 4 * B * num_heads * sq_pad * S * head_dim)  # QK^T and PV
    bytes_accessed = (B * (sq_pad + 2 * S) * E * 2       # bf16 q, k, v
                      + B * sq_pad * E * 4               # f32 output
                      + 4 * E * E * 2                    # bf16 weights
                      + 4 * E * 4)                       # f32 biases
    cost = pl.CostEstimate(flops=flops,
                           transcendentals=B * num_heads * sq_pad * S,
                           bytes_accessed=bytes_accessed)

    out = pl.pallas_call(
        kernel,
        out_shape=jax.ShapeDtypeStruct((B, sq_pad, E), query.dtype),
        grid_spec=pltpu.PrefetchScalarGridSpec(
            num_scalar_prefetch=0,
            grid=(B, n_q),
            in_specs=[
                q_spec, kv_spec, kv_spec,                 # q, k, v
                mat_spec, mat_spec, mat_spec, mat_spec,   # Wq, Wk, Wv, Wo
                vec_spec, vec_spec, vec_spec, vec_spec,   # bq, bk, bv, bo
            ],
            out_specs=o_spec,
            scratch_shapes=[
                pltpu.VMEM((num_heads, S, head_dim), jnp.bfloat16),   # Kh cache
                pltpu.VMEM((num_heads, S, head_dim), jnp.bfloat16),   # Vh cache
            ],
        ),
        compiler_params=pltpu.CompilerParams(
            # qi must run sequentially so the per-batch K/V scratch stays valid;
            # b is still sharded across TensorCores.
            dimension_semantics=("parallel", "arbitrary"),
            vmem_limit_bytes=_vmem_limit_bytes()),
        cost_estimate=cost,
    )(q_b, k_b, v_b, wq_b, wk_b, wv_b, wo_b, bq2, bk2, bv2, bo2)

    return out[:, :Sq, :] if sq_pad != Sq else out


def _reference(query, key, value, params, *, num_heads):
    """Pure-JAX (f32) reference mirroring the PyTorch module semantics."""
    B, S, E = query.shape
    head_dim = E // num_heads
    wq, bq, wk, bk, wv, bv, wo, bo = params
    Q = query @ wq + bq
    K = key @ wk + bk
    V = value @ wv + bv
    outs = []
    for h in range(num_heads):
        sl = slice(h * head_dim, (h + 1) * head_dim)
        Qh, Kh, Vh = Q[..., sl], K[..., sl], V[..., sl]
        scores = jnp.einsum("bqd,bkd->bqk", Qh, Kh) / math.sqrt(head_dim)
        w = jax.nn.softmax(scores, axis=-1)
        outs.append(jnp.einsum("bqk,bkd->bqd", w, Vh))
    ctx = jnp.concatenate(outs, axis=-1)
    return ctx @ wo + bo


def init_params(key, embed_dim):
    ks = jax.random.split(key, 8)
    scale = 0.05
    wq = scale * jax.random.normal(ks[0], (embed_dim, embed_dim), jnp.float32)
    bq = scale * jax.random.normal(ks[1], (embed_dim,), jnp.float32)
    wk = scale * jax.random.normal(ks[2], (embed_dim, embed_dim), jnp.float32)
    bk = scale * jax.random.normal(ks[3], (embed_dim,), jnp.float32)
    wv = scale * jax.random.normal(ks[4], (embed_dim, embed_dim), jnp.float32)
    bv = scale * jax.random.normal(ks[5], (embed_dim,), jnp.float32)
    wo = scale * jax.random.normal(ks[6], (embed_dim, embed_dim), jnp.float32)
    bo = scale * jax.random.normal(ks[7], (embed_dim,), jnp.float32)
    return (wq, bq, wk, bk, wv, bv, wo, bo)


if __name__ == "__main__":
    B, S, E, H = 2, 8, 32, 4   # batch, seq, embed_dim, num_heads (head_dim = 8)

    root = jax.random.PRNGKey(0)
    k_params, kq, kk, kv = jax.random.split(root, 4)

    params = init_params(k_params, E)
    query = jax.random.normal(kq, (B, S, E), jnp.float32)
    key = jax.random.normal(kk, (B, S, E), jnp.float32)
    value = jax.random.normal(kv, (B, S, E), jnp.float32)

    out = multi_head_attention(query, key, value, params, num_heads=H)
    out = jax.block_until_ready(out)

    ref = _reference(query, key, value, params, num_heads=H)
    assert out.shape == (B, S, E)
    # bf16 activations/weights on the MXU + approx-reciprocal softmax -> loosened tolerance.
    assert jnp.allclose(out, ref, atol=2e-2, rtol=2e-2), "mismatch vs JAX reference"

    print("KERNEL_OK")
</pallas_src>

<mosaic_0001>
module attributes {stable_mosaic.version = 11 : i64} {
  func.func @_mha_kernel(%arg0: i32, %arg1: i32, %arg2: memref<1x8x32xbf16, #tpu.memory_space<vmem>>, %arg3: memref<1x8x32xbf16, #tpu.memory_space<vmem>>, %arg4: memref<1x8x32xbf16, #tpu.memory_space<vmem>>, %arg5: memref<32x32xbf16, #tpu.memory_space<vmem>>, %arg6: memref<32x32xbf16, #tpu.memory_space<vmem>>, %arg7: memref<32x32xbf16, #tpu.memory_space<vmem>>, %arg8: memref<32x32xbf16, #tpu.memory_space<vmem>>, %arg9: memref<1x32xf32, #tpu.memory_space<vmem>>, %arg10: memref<1x32xf32, #tpu.memory_space<vmem>>, %arg11: memref<1x32xf32, #tpu.memory_space<vmem>>, %arg12: memref<1x32xf32, #tpu.memory_space<vmem>>, %arg13: memref<1x8x32xf32, #tpu.memory_space<vmem>>, %arg14: memref<4x8x8xbf16, #tpu.memory_space<vmem>>, %arg15: memref<4x8x8xbf16, #tpu.memory_space<vmem>>) attributes {dimension_semantics = [#tpu.dimension_semantics<parallel>, #tpu.dimension_semantics<arbitrary>], iteration_bounds = array<i64: 2, 1>, scalar_prefetch = 0 : i64, scratch_operands = 2 : i64, tpu.core_type = #tpu.core_type<tc>, window_params = [{transform_indices = @transform_0, window_bounds = array<i64: 1, 8, 32>}, {transform_indices = @transform_1, window_bounds = array<i64: 1, 8, 32>}, {transform_indices = @transform_2, window_bounds = array<i64: 1, 8, 32>}, {pipeline_mode = #tpu.pipeline_mode<synchronous>, transform_indices = @transform_3, window_bounds = array<i64: 32, 32>}, {pipeline_mode = #tpu.pipeline_mode<synchronous>, transform_indices = @transform_4, window_bounds = array<i64: 32, 32>}, {pipeline_mode = #tpu.pipeline_mode<synchronous>, transform_indices = @transform_5, window_bounds = array<i64: 32, 32>}, {pipeline_mode = #tpu.pipeline_mode<synchronous>, transform_indices = @transform_6, window_bounds = array<i64: 32, 32>}, {pipeline_mode = #tpu.pipeline_mode<synchronous>, transform_indices = @transform_7, window_bounds = array<i64: 1, 32>}, {pipeline_mode = #tpu.pipeline_mode<synchronous>, transform_indices = @transform_8, window_bounds = array<i64: 1, 32>}, {pipeline_mode = #tpu.pipeline_mode<synchronous>, transform_indices = @transform_9, window_bounds = array<i64: 1, 32>}, {pipeline_mode = #tpu.pipeline_mode<synchronous>, transform_indices = @transform_10, window_bounds = array<i64: 1, 32>}, {transform_indices = @transform_11, window_bounds = array<i64: 1, 8, 32>}]} {
    %c0_i32 = arith.constant 0 : i32
    %0 = arith.cmpi eq, %arg1, %c0_i32 : i32
    %1 = arith.extui %0 : i1 to i32
    %c0_i32_0 = arith.constant 0 : i32
    %2 = arith.cmpi ne, %1, %c0_i32_0 : i32
    scf.if %2 {
      %c0_26 = arith.constant 0 : index
      %c0_27 = arith.constant 0 : index
      %c0_28 = arith.constant 0 : index
      %41 = vector.load %arg3[%c0_26, %c0_27, %c0_28] : memref<1x8x32xbf16, #tpu.memory_space<vmem>>, vector<1x8x32xbf16>
      %42 = vector.shape_cast %41 : vector<1x8x32xbf16> to vector<8x32xbf16>
      %c0_29 = arith.constant 0 : index
      %c0_30 = arith.constant 0 : index
      %c0_31 = arith.constant 0 : index
      %43 = vector.load %arg4[%c0_29, %c0_30, %c0_31] : memref<1x8x32xbf16, #tpu.memory_space<vmem>>, vector<1x8x32xbf16>
      %44 = vector.shape_cast %43 : vector<1x8x32xbf16> to vector<8x32xbf16>
      %c0_32 = arith.constant 0 : index
      %c0_33 = arith.constant 0 : index
      %45 = vector.load %arg6[%c0_32, %c0_33] : memref<32x32xbf16, #tpu.memory_space<vmem>>, vector<32x32xbf16>
      %cst_34 = arith.constant dense<0.000000e+00> : vector<8x32xf32>
      %46 = tpu.matmul %42, %45, %cst_34 {dimension_numbers = #tpu.dot_dimension_numbers<[1], [0], [0], [1], [0, 0, 1, 1], [], []>} : vector<8x32xbf16>, vector<32x32xbf16>, vector<8x32xf32> -> vector<8x32xf32>
      %c0_35 = arith.constant 0 : index
      %c0_36 = arith.constant 0 : index
      %47 = vector.load %arg10[%c0_35, %c0_36] : memref<1x32xf32, #tpu.memory_space<vmem>>, vector<1x32xf32>
      %48 = vector.broadcast %47 : vector<1x32xf32> to vector<8x32xf32>
      %49 = arith.addf %46, %48 : vector<8x32xf32>
      %c0_37 = arith.constant 0 : index
      %c0_38 = arith.constant 0 : index
      %50 = vector.load %arg7[%c0_37, %c0_38] : memref<32x32xbf16, #tpu.memory_space<vmem>>, vector<32x32xbf16>
      %cst_39 = arith.constant dense<0.000000e+00> : vector<8x32xf32>
      %51 = tpu.matmul %44, %50, %cst_39 {dimension_numbers = #tpu.dot_dimension_numbers<[1], [0], [0], [1], [0, 0, 1, 1], [], []>} : vector<8x32xbf16>, vector<32x32xbf16>, vector<8x32xf32> -> vector<8x32xf32>
      %c0_40 = arith.constant 0 : index
      %c0_41 = arith.constant 0 : index
      %52 = vector.load %arg11[%c0_40, %c0_41] : memref<1x32xf32, #tpu.memory_space<vmem>>, vector<1x32xf32>
      %53 = vector.broadcast %52 : vector<1x32xf32> to vector<8x32xf32>
      %54 = arith.addf %51, %53 : vector<8x32xf32>
      %55 = vector.shape_cast %49 : vector<8x32xf32> to vector<8x4x8xf32>
      %56 = tpu.transpose %55, [1, 0, 2] : vector<8x4x8xf32> -> vector<4x8x8xf32>
      %57 = arith.truncf %56 : vector<4x8x8xf32> to vector<4x8x8xbf16>
      %c0_42 = arith.constant 0 : index
      %c0_43 = arith.constant 0 : index
      %c0_44 = arith.constant 0 : index
      %58 = vector.load %arg14[%c0_42, %c0_43, %c0_44] : memref<4x8x8xbf16, #tpu.memory_space<vmem>>, vector<4x8x8xbf16>
      tpu.vector_store %arg14[%c0_42, %c0_43, %c0_44], %57 {strides = array<i32>} : memref<4x8x8xbf16, #tpu.memory_space<vmem>>, vector<4x8x8xbf16>,
      %59 = vector.shape_cast %54 : vector<8x32xf32> to vector<8x4x8xf32>
      %60 = tpu.transpose %59, [1, 0, 2] : vector<8x4x8xf32> -> vector<4x8x8xf32>
      %61 = arith.truncf %60 : vector<4x8x8xf32> to vector<4x8x8xbf16>
      %c0_45 = arith.constant 0 : index
      %c0_46 = arith.constant 0 : index
      %c0_47 = arith.constant 0 : index
      %62 = vector.load %arg15[%c0_45, %c0_46, %c0_47] : memref<4x8x8xbf16, #tpu.memory_space<vmem>>, vector<4x8x8xbf16>
      tpu.vector_store %arg15[%c0_45, %c0_46, %c0_47], %61 {strides = array<i32>} : memref<4x8x8xbf16, #tpu.memory_space<vmem>>, vector<4x8x8xbf16>,
    } else {
    }
    %c0 = arith.constant 0 : index
    %c0_1 = arith.constant 0 : index
    %c0_2 = arith.constant 0 : index
    %3 = vector.load %arg2[%c0, %c0_1, %c0_2] : memref<1x8x32xbf16, #tpu.memory_space<vmem>>, vector<1x8x32xbf16>
    %4 = vector.shape_cast %3 : vector<1x8x32xbf16> to vector<8x32xbf16>
    %c0_3 = arith.constant 0 : index
    %c0_4 = arith.constant 0 : index
    %5 = vector.load %arg5[%c0_3, %c0_4] : memref<32x32xbf16, #tpu.memory_space<vmem>>, vector<32x32xbf16>
    %cst = arith.constant dense<0.000000e+00> : vector<8x32xf32>
    %6 = tpu.matmul %4, %5, %cst {dimension_numbers = #tpu.dot_dimension_numbers<[1], [0], [0], [1], [0, 0, 1, 1], [], []>} : vector<8x32xbf16>, vector<32x32xbf16>, vector<8x32xf32> -> vector<8x32xf32>
    %c0_5 = arith.constant 0 : index
    %c0_6 = arith.constant 0 : index
    %7 = vector.load %arg9[%c0_5, %c0_6] : memref<1x32xf32, #tpu.memory_space<vmem>>, vector<1x32xf32>
    %8 = vector.broadcast %7 : vector<1x32xf32> to vector<8x32xf32>
    %9 = arith.addf %6, %8 : vector<8x32xf32>
    %10 = vector.shape_cast %9 : vector<8x32xf32> to vector<8x4x8xf32>
    %11 = tpu.transpose %10, [1, 0, 2] : vector<8x4x8xf32> -> vector<4x8x8xf32>
    %12 = arith.truncf %11 : vector<4x8x8xf32> to vector<4x8x8xbf16>
    %c0_7 = arith.constant 0 : index
    %c0_8 = arith.constant 0 : index
    %c0_9 = arith.constant 0 : index
    %13 = vector.load %arg14[%c0_7, %c0_8, %c0_9] : memref<4x8x8xbf16, #tpu.memory_space<vmem>>, vector<4x8x8xbf16>
    "tpu.trace_start"() <{level = 10 : i32, message = "hqd,hkd->hqk"}> : () -> ()
    %cst_10 = arith.constant dense<0.000000e+00> : vector<4x8x8xf32>
    %14 = tpu.matmul %12, %13, %cst_10 {dimension_numbers = #tpu.dot_dimension_numbers<[2], [2], [1], [1], [0, 0, 0, 1, 1, 1], [0], [0]>} : vector<4x8x8xbf16>, vector<4x8x8xbf16>, vector<4x8x8xf32> -> vector<4x8x8xf32>
    "tpu.trace_stop"() : () -> ()
    %cst_11 = arith.constant 0.353553385 : f32
    %15 = vector.broadcast %cst_11 : f32 to vector<4x8x8xf32>
    %16 = arith.mulf %14, %15 : vector<4x8x8xf32>
    %cst_12 = arith.constant dense<0xFF800000> : vector<4x8xf32>
    %17 = vector.multi_reduction <maximumf>, %16, %cst_12 [2] : vector<4x8x8xf32> to vector<4x8xf32>
    %18 = vector.shape_cast %17 : vector<4x8xf32> to vector<4x8x1xf32>
    %19 = vector.broadcast %18 : vector<4x8x1xf32> to vector<4x8x8xf32>
    %20 = arith.subf %16, %19 : vector<4x8x8xf32>
    %21 = math.exp %20 : vector<4x8x8xf32>
    %cst_13 = arith.constant dense<0.000000e+00> : vector<4x8xf32>
    %22 = vector.multi_reduction <add>, %21, %cst_13 [2] : vector<4x8x8xf32> to vector<4x8xf32>
    %23 = vector.shape_cast %22 : vector<4x8xf32> to vector<4x8x1xf32>
    %24 = tpu.reciprocal %23 {approx = true} : vector<4x8x1xf32> -> vector<4x8x1xf32>
    %25 = vector.broadcast %24 : vector<4x8x1xf32> to vector<4x8x8xf32>
    %26 = arith.mulf %21, %25 : vector<4x8x8xf32>
    %27 = arith.truncf %26 : vector<4x8x8xf32> to vector<4x8x8xbf16>
    %c0_14 = arith.constant 0 : index
    %c0_15 = arith.constant 0 : index
    %c0_16 = arith.constant 0 : index
    %28 = vector.load %arg15[%c0_14, %c0_15, %c0_16] : memref<4x8x8xbf16, #tpu.memory_space<vmem>>, vector<4x8x8xbf16>
    "tpu.trace_start"() <{level = 10 : i32, message = "hqk,hkd->hqd"}> : () -> ()
    %cst_17 = arith.constant dense<0.000000e+00> : vector<4x8x8xf32>
    %29 = tpu.matmul %27, %28, %cst_17 {dimension_numbers = #tpu.dot_dimension_numbers<[2], [1], [1], [2], [0, 0, 0, 1, 1, 2], [0], [0]>} : vector<4x8x8xbf16>, vector<4x8x8xbf16>, vector<4x8x8xf32> -> vector<4x8x8xf32>
    "tpu.trace_stop"() : () -> ()
    %30 = tpu.transpose %29, [1, 0, 2] : vector<4x8x8xf32> -> vector<8x4x8xf32>
    %31 = vector.shape_cast %30 : vector<8x4x8xf32> to vector<8x32xf32>
    %32 = arith.truncf %31 : vector<8x32xf32> to vector<8x32xbf16>
    %c0_18 = arith.constant 0 : index
    %c0_19 = arith.constant 0 : index
    %33 = vector.load %arg8[%c0_18, %c0_19] : memref<32x32xbf16, #tpu.memory_space<vmem>>, vector<32x32xbf16>
    %cst_20 = arith.constant dense<0.000000e+00> : vector<8x32xf32>
    %34 = tpu.matmul %32, %33, %cst_20 {dimension_numbers = #tpu.dot_dimension_numbers<[1], [0], [0], [1], [0, 0, 1, 1], [], []>} : vector<8x32xbf16>, vector<32x32xbf16>, vector<8x32xf32> -> vector<8x32xf32>
    %c0_21 = arith.constant 0 : index
    %c0_22 = arith.constant 0 : index
    %35 = vector.load %arg12[%c0_21, %c0_22] : memref<1x32xf32, #tpu.memory_space<vmem>>, vector<1x32xf32>
    %36 = vector.broadcast %35 : vector<1x32xf32> to vector<8x32xf32>
    %37 = arith.addf %34, %36 : vector<8x32xf32>
    %c0_23 = arith.constant 0 : index
    %c0_24 = arith.constant 0 : index
    %c0_25 = arith.constant 0 : index
    %38 = vector.load %arg13[%c0_23, %c0_24, %c0_25] : memref<1x8x32xf32, #tpu.memory_space<vmem>>, vector<1x8x32xf32>
    %39 = vector.shape_cast %38 : vector<1x8x32xf32> to vector<8x32xf32>
    %40 = vector.shape_cast %37 : vector<8x32xf32> to vector<1x8x32xf32>
    tpu.vector_store %arg13[%c0_23, %c0_24, %c0_25], %40 {strides = array<i32>} : memref<1x8x32xf32, #tpu.memory_space<vmem>>, vector<1x8x32xf32>,
    return
  }
  func.func @transform_0(%arg0: i32, %arg1: i32) -> (i32, i32, i32) {
    %c0_i32 = arith.constant 0 : i32
    %c0_i32_0 = arith.constant 0 : i32
    return %arg0, %arg1, %c0_i32 : i32, i32, i32
  }
  func.func @transform_1(%arg0: i32, %arg1: i32) -> (i32, i32, i32) {
    %c0_i32 = arith.constant 0 : i32
    %c0_i32_0 = arith.constant 0 : i32
    %c0_i32_1 = arith.constant 0 : i32
    return %arg0, %c0_i32, %c0_i32_0 : i32, i32, i32
  }
  func.func @transform_2(%arg0: i32, %arg1: i32) -> (i32, i32, i32) {
    %c0_i32 = arith.constant 0 : i32
    %c0_i32_0 = arith.constant 0 : i32
    %c0_i32_1 = arith.constant 0 : i32
    return %arg0, %c0_i32, %c0_i32_0 : i32, i32, i32
  }
  func.func @transform_3(%arg0: i32, %arg1: i32) -> (i32, i32) {
    %c0_i32 = arith.constant 0 : i32
    %c0_i32_0 = arith.constant 0 : i32
    %c0_i32_1 = arith.constant 0 : i32
    return %c0_i32, %c0_i32_0 : i32, i32
  }
  func.func @transform_4(%arg0: i32, %arg1: i32) -> (i32, i32) {
    %c0_i32 = arith.constant 0 : i32
    %c0_i32_0 = arith.constant 0 : i32
    %c0_i32_1 = arith.constant 0 : i32
    return %c0_i32, %c0_i32_0 : i32, i32
  }
  func.func @transform_5(%arg0: i32, %arg1: i32) -> (i32, i32) {
    %c0_i32 = arith.constant 0 : i32
    %c0_i32_0 = arith.constant 0 : i32
    %c0_i32_1 = arith.constant 0 : i32
    return %c0_i32, %c0_i32_0 : i32, i32
  }
  func.func @transform_6(%arg0: i32, %arg1: i32) -> (i32, i32) {
    %c0_i32 = arith.constant 0 : i32
    %c0_i32_0 = arith.constant 0 : i32
    %c0_i32_1 = arith.constant 0 : i32
    return %c0_i32, %c0_i32_0 : i32, i32
  }
  func.func @transform_7(%arg0: i32, %arg1: i32) -> (i32, i32) {
    %c0_i32 = arith.constant 0 : i32
    %c0_i32_0 = arith.constant 0 : i32
    %c0_i32_1 = arith.constant 0 : i32
    return %c0_i32, %c0_i32_0 : i32, i32
  }
  func.func @transform_8(%arg0: i32, %arg1: i32) -> (i32, i32) {
    %c0_i32 = arith.constant 0 : i32
    %c0_i32_0 = arith.constant 0 : i32
    %c0_i32_1 = arith.constant 0 : i32
    return %c0_i32, %c0_i32_0 : i32, i32
  }
  func.func @transform_9(%arg0: i32, %arg1: i32) -> (i32, i32) {
    %c0_i32 = arith.constant 0 : i32
    %c0_i32_0 = arith.constant 0 : i32
    %c0_i32_1 = arith.constant 0 : i32
    return %c0_i32, %c0_i32_0 : i32, i32
  }
  func.func @transform_10(%arg0: i32, %arg1: i32) -> (i32, i32) {
    %c0_i32 = arith.constant 0 : i32
    %c0_i32_0 = arith.constant 0 : i32
    %c0_i32_1 = arith.constant 0 : i32
    return %c0_i32, %c0_i32_0 : i32, i32
  }
  func.func @transform_11(%arg0: i32, %arg1: i32) -> (i32, i32, i32) {
    %c0_i32 = arith.constant 0 : i32
    %c0_i32_0 = arith.constant 0 : i32
    return %arg0, %arg1, %c0_i32 : i32, i32, i32
  }
}

</mosaic_0001>

<llo_original>
// kernel: tpu_custom_call.1
$region0: #{tpu_custom_call.1}
  #allocation0 [shape = 'u32[]', space=smem, size = 0x4, offset = 0x4, fixed_abs, tag = 'smem constant byte address 0x4 - core index']
  #allocation1 [shape = 'u32[144,128]{1,0:T(1,128)}', space=vmem, size = 0x12000, scoped, tag = 'internal scratch']
  #allocation2 [shape = 'bf16[4,8,8]{2,1,0:T(8,128)(2,1)}', space=vmem, size = 0x2000, scoped, tag = 'scratch operand']
  #allocation3 [shape = 'bf16[4,8,8]{2,1,0:T(8,128)(2,1)}', space=vmem, size = 0x2000, scoped, tag = 'scratch operand']
  %s0 = inlined_call_operand.hbm [shape: bf16[2,8,32], index: 0, kind: input, shape index: {}]
  %s1 = inlined_call_operand.hbm [shape: bf16[2,8,32], index: 1, kind: input, shape index: {}]
  %s2 = inlined_call_operand.hbm [shape: bf16[2,8,32], index: 2, kind: input, shape index: {}]
  %s3 = inlined_call_operand.hbm [shape: bf16[32,32], index: 3, kind: input, shape index: {}]
  %s4 = inlined_call_operand.hbm [shape: bf16[32,32], index: 4, kind: input, shape index: {}]
  %s5 = inlined_call_operand.hbm [shape: bf16[32,32], index: 5, kind: input, shape index: {}]
  %s6 = inlined_call_operand.hbm [shape: bf16[32,32], index: 6, kind: input, shape index: {}]
  %s7 = inlined_call_operand.hbm [shape: f32[1,32], index: 7, kind: input, shape index: {}]
  %s8 = inlined_call_operand.hbm [shape: f32[1,32], index: 8, kind: input, shape index: {}]
  %s9 = inlined_call_operand.hbm [shape: f32[1,32], index: 9, kind: input, shape index: {}]
  %s10 = inlined_call_operand.hbm [shape: f32[1,32], index: 10, kind: input, shape index: {}]
  %s11 = inlined_call_operand.hbm [shape: f32[2,8,32], index: 11, kind: output, shape index: {}]
  %s12 = sld [smem:[#allocation0]]
  $region125: #{tpu_custom_call.1} parent=0
    _
  %s14 = ssub.s32 1, %s12
  %s15 = scalar_select 0, %s14, %s12
  $region1: #{tpu_custom_call.1} parent=0
    #allocation4 [shape = 'u8[4096]{0}', space=vmem, size = 0x1000, scoped, tag = 'input window, operand 0']
    #allocation5 [shape = 's32[2]{0}', space=sflag, size = 0x8, scoped, tag = 'scoped memory for tpu_custom_call.1']
    #allocation6 [shape = 's32[2]{0}', space=sflag, size = 0x8, scoped, tag = 'scoped memory for tpu_custom_call.1']
    #allocation7 [shape = 'u8[4096]{0}', space=vmem, size = 0x1000, scoped, tag = 'input window, operand 1']
    #allocation8 [shape = 's32[2]{0}', space=sflag, size = 0x8, scoped, tag = 'scoped memory for tpu_custom_call.1']
    #allocation9 [shape = 'u8[4096]{0}', space=vmem, size = 0x1000, scoped, tag = 'input window, operand 2']
    #allocation10 [shape = 'u8[8192]{0}', space=vmem, size = 0x2000, scoped, tag = 'input window, operand 3, single buffered']
    #allocation11 [shape = 's32[1]{0}', space=sflag, size = 0x4, scoped, tag = 'scoped memory for tpu_custom_call.1']
    #allocation12 [shape = 'u8[8192]{0}', space=vmem, size = 0x2000, scoped, tag = 'input window, operand 4, single buffered']
    #allocation13 [shape = 'u8[8192]{0}', space=vmem, size = 0x2000, scoped, tag = 'input window, operand 5, single buffered']
    #allocation14 [shape = 's32[1]{0}', space=sflag, size = 0x4, scoped, tag = 'scoped memory for tpu_custom_call.1']
    #allocation15 [shape = 'u8[8192]{0}', space=vmem, size = 0x2000, scoped, tag = 'input window, operand 6, single buffered']
    #allocation16 [shape = 'u8[512]{0}', space=vmem, size = 0x400, scoped, tag = 'input window, operand 7, single buffered']
    #allocation17 [shape = 's32[1]{0}', space=sflag, size = 0x4, scoped, tag = 'scoped memory for tpu_custom_call.1']
    #allocation18 [shape = 'u8[512]{0}', space=vmem, size = 0x400, scoped, tag = 'input window, operand 8, single buffered']
    #allocation19 [shape = 'u8[512]{0}', space=vmem, size = 0x400, scoped, tag = 'input window, operand 9, single buffered']
    #allocation20 [shape = 's32[1]{0}', space=sflag, size = 0x4, scoped, tag = 'scoped memory for tpu_custom_call.1']
    #allocation21 [shape = 'u8[512]{0}', space=vmem, size = 0x400, scoped, tag = 'input window, operand 10, single buffered']
    #allocation22 [shape = 'u8[8192]{0}', space=vmem, size = 0x2000, scoped, tag = 'output window, operand 0']
    %16 = vsyncpa [#allocation5], 0
    %s17 = scalar_lea.sflag [#allocation5], 1
    %18 = vsyncpa %s17, 0
    %19 = vsyncpa [#allocation8], 0
    %s20 = scalar_lea.sflag [#allocation8], 1
    %21 = vsyncpa %s20, 0
    %22 = vsyncpa [#allocation11], 0
    %23 = vsyncpa [#allocation14], 0
    %24 = vsyncpa [#allocation17], 0
    %25 = vsyncpa [#allocation20], 0
    %26 = vsyncpa [#allocation6], 0
    %s27 = scalar_lea.sflag [#allocation6], 1
    %28 = vsyncpa %s27, 0
    loop: start=0, step=1, limit=4
    $region2: #{tpu_custom_call.1} parent=1 // loop_pre_header
      _
    $region3: #{tpu_custom_call.1} parent=1 // loop_header
      %s30 = sphi 0, %s34
      %p31 = scmp.ge.s32.totalorder %s30, 4
      %s37 = sphi 0, %s49
      %s38 = sphi 0, %s45
      %s39 = sphi 0, %s37
      %s40 = sphi 0, %s38
      %s41 = sphi 0, %s39
      %s42 = sphi 0, %s40
      %s54 = sphi 0, %s56
      %s57 = sphi 0, %s54
      %s58 = sphi 0, %s57
      %s74 = sphi 0, %s58
      %s80 = sphi 0, %s82
      %s83 = sphi 0, %s80
      %s84 = sphi 0, %s83
      %s100 = sphi 0, %s84
      %s106 = sphi 0, %s108
      %s109 = sphi 0, %s106
      %s110 = sphi 0, %s109
      %s126 = sphi 0, %s110
      %s130 = sphi 0, %s130
      %s132 = sphi 0, %s130
      %s133 = sphi 0, %s132
      %s147 = sphi 0, %s133
      %s151 = sphi 0, %s151
      %s153 = sphi 0, %s151
      %s154 = sphi 0, %s153
      %s168 = sphi 0, %s154
      %s172 = sphi 0, %s172
      %s174 = sphi 0, %s172
      %s175 = sphi 0, %s174
      %s189 = sphi 0, %s175
      %s193 = sphi 0, %s193
      %s195 = sphi 0, %s193
      %s196 = sphi 0, %s195
      %s210 = sphi 0, %s196
      %s214 = sphi 0, %s214
      %s216 = sphi 0, %s214
      %s217 = sphi 0, %s216
      %s231 = sphi 0, %s217
      %s235 = sphi 0, %s235
      %s237 = sphi 0, %s235
      %s238 = sphi 0, %s237
      %s252 = sphi 0, %s238
      %s256 = sphi 0, %s256
      %s258 = sphi 0, %s256
      %s259 = sphi 0, %s258
      %s273 = sphi 0, %s259
      %s277 = sphi 0, %s277
      %s279 = sphi 0, %s277
      %s280 = sphi 0, %s279
      %s294 = sphi 0, %s280
      %s302 = sphi 0, %s304
      %s305 = sphi 0, %s302
      %s306 = sphi 0, %s305
      %s322 = sphi 0, %s306
    $region4: #{tpu_custom_call.1} parent=1 // loop_header_branch
      %33 = sbr.rel (%p31) target = $region8
    $region5: #{tpu_custom_call.1} parent=1 // loop_body
      %s35 = ssub.s32 %s30, 1
      %s36 = ssub.s32 %s30, 2
      %s43 = sadd.s32 1, %s38
      %p44 = scmp.ge.s32.totalorder %s43, 1
      %s45 = scalar_select %p44, 0, %s43
      %s46 = sadd.s32 1, %s37
      %s47 = scalar_select %p44, %s46, %s37
      %p48 = scmp.ge.s32.totalorder %s47, 2
      %s49 = scalar_select %p48, 0, %s47
      %s50 = ssub.s32 %s37, %s49
      %s51 = ssub.s32 %s38, %s45
      %s52 = sor.u32 %s50, %s51
      %p53 = scmp.eq.s32.totalorder %s52, 0
      %s55 = sadd.s32 %s54, 1
      %s56 = scalar_select %p53, %s54, %s55
      %p59 = pneg %p53
      %p60 = scmp.eq.s32.totalorder %s30, 1
      %p61 = por %p59, %p60
      %p62 = scmp.ne.s32.totalorder %s54, %s57
      %p63 = scmp.eq.s32.totalorder %s30, 0
      %p64 = por %p62, %p63
      %p65 = scmp.ne.s32.totalorder %s54, %s57
      %p66 = scmp.eq.s32.totalorder %s35, 1
      %p67 = por %p65, %p66
      %p68 = scmp.ne.s32.totalorder %s57, %s58
      %p69 = scmp.eq.s32.totalorder %s35, 0
      %p70 = por %p68, %p69
      %p71 = scmp.ne.s32.totalorder %s57, %s58
      %p72 = scmp.eq.s32.totalorder %s36, 1
      %p73 = por %p71, %p72
      %p75 = scmp.ne.s32.totalorder %s58, %s74
      %p76 = scmp.eq.s32.totalorder %s36, 0
      %p77 = por %p75, %p76
      %s78 = ssub.s32 %s37, %s49
      %p79 = scmp.eq.s32.totalorder %s78, 0
      %s81 = sadd.s32 %s80, 1
      %s82 = scalar_select %p79, %s80, %s81
      %p85 = pneg %p79
      %p86 = scmp.eq.s32.totalorder %s30, 1
      %p87 = por %p85, %p86
      %p88 = scmp.ne.s32.totalorder %s80, %s83
      %p89 = scmp.eq.s32.totalorder %s30, 0
      %p90 = por %p88, %p89
      %p91 = scmp.ne.s32.totalorder %s80, %s83
      %p92 = scmp.eq.s32.totalorder %s35, 1
      %p93 = por %p91, %p92
      %p94 = scmp.ne.s32.totalorder %s83, %s84
      %p95 = scmp.eq.s32.totalorder %s35, 0
      %p96 = por %p94, %p95
      %p97 = scmp.ne.s32.totalorder %s83, %s84
      %p98 = scmp.eq.s32.totalorder %s36, 1
      %p99 = por %p97, %p98
      %p101 = scmp.ne.s32.totalorder %s84, %s100
      %p102 = scmp.eq.s32.totalorder %s36, 0
      %p103 = por %p101, %p102
      %s104 = ssub.s32 %s37, %s49
      %p105 = scmp.eq.s32.totalorder %s104, 0
      %s107 = sadd.s32 %s106, 1
      %s108 = scalar_select %p105, %s106, %s107
      %p111 = pneg %p105
      %p112 = scmp.eq.s32.totalorder %s30, 1
      %p113 = por %p111, %p112
      %p114 = scmp.ne.s32.totalorder %s106, %s109
      %p115 = scmp.eq.s32.totalorder %s30, 0
      %p116 = por %p114, %p115
      %p117 = scmp.ne.s32.totalorder %s106, %s109
      %p118 = scmp.eq.s32.totalorder %s35, 1
      %p119 = por %p117, %p118
      %p120 = scmp.ne.s32.totalorder %s109, %s110
      %p121 = scmp.eq.s32.totalorder %s35, 0
      %p122 = por %p120, %p121
      %p123 = scmp.ne.s32.totalorder %s109, %s110
      %p124 = scmp.eq.s32.totalorder %s36, 1
      %p125 = por %p123, %p124
      %p127 = scmp.ne.s32.totalorder %s110, %s126
      %p128 = scmp.eq.s32.totalorder %s36, 0
      %p129 = por %p127, %p128
      %s131 = sadd.s32 %s130, 1
      %p134 = scmp.eq.s32.totalorder %s30, 1
      %p135 = scmp.ne.s32.totalorder %s130, %s132
      %p136 = scmp.eq.s32.totalorder %s30, 0
      %p137 = por %p135, %p136
      %p138 = scmp.ne.s32.totalorder %s130, %s132
      %p139 = scmp.eq.s32.totalorder %s35, 1
      %p140 = por %p138, %p139
      %p141 = scmp.ne.s32.totalorder %s132, %s133
      %p142 = scmp.eq.s32.totalorder %s35, 0
      %p143 = por %p141, %p142
      %p144 = scmp.ne.s32.totalorder %s132, %s133
      %p145 = scmp.eq.s32.totalorder %s36, 1
      %p146 = por %p144, %p145
      %p148 = scmp.ne.s32.totalorder %s133, %s147
      %p149 = scmp.eq.s32.totalorder %s36, 0
      %p150 = por %p148, %p149
      %s152 = sadd.s32 %s151, 1
      %p155 = scmp.eq.s32.totalorder %s30, 1
      %p156 = scmp.ne.s32.totalorder %s151, %s153
      %p157 = scmp.eq.s32.totalorder %s30, 0
      %p158 = por %p156, %p157
      %p159 = scmp.ne.s32.totalorder %s151, %s153
      %p160 = scmp.eq.s32.totalorder %s35, 1
      %p161 = por %p159, %p160
      %p162 = scmp.ne.s32.totalorder %s153, %s154
      %p163 = scmp.eq.s32.totalorder %s35, 0
      %p164 = por %p162, %p163
      %p165 = scmp.ne.s32.totalorder %s153, %s154
      %p166 = scmp.eq.s32.totalorder %s36, 1
      %p167 = por %p165, %p166
      %p169 = scmp.ne.s32.totalorder %s154, %s168
      %p170 = scmp.eq.s32.totalorder %s36, 0
      %p171 = por %p169, %p170
      %s173 = sadd.s32 %s172, 1
      %p176 = scmp.eq.s32.totalorder %s30, 1
      %p177 = scmp.ne.s32.totalorder %s172, %s174
      %p178 = scmp.eq.s32.totalorder %s30, 0
      %p179 = por %p177, %p178
      %p180 = scmp.ne.s32.totalorder %s172, %s174
      %p181 = scmp.eq.s32.totalorder %s35, 1
      %p182 = por %p180, %p181
      %p183 = scmp.ne.s32.totalorder %s174, %s175
      %p184 = scmp.eq.s32.totalorder %s35, 0
      %p185 = por %p183, %p184
      %p186 = scmp.ne.s32.totalorder %s174, %s175
      %p187 = scmp.eq.s32.totalorder %s36, 1
      %p188 = por %p186, %p187
      %p190 = scmp.ne.s32.totalorder %s175, %s189
      %p191 = scmp.eq.s32.totalorder %s36, 0
      %p192 = por %p190, %p191
      %s194 = sadd.s32 %s193, 1
      %p197 = scmp.eq.s32.totalorder %s30, 1
      %p198 = scmp.ne.s32.totalorder %s193, %s195
      %p199 = scmp.eq.s32.totalorder %s30, 0
      %p200 = por %p198, %p199
      %p201 = scmp.ne.s32.totalorder %s193, %s195
      %p202 = scmp.eq.s32.totalorder %s35, 1
      %p203 = por %p201, %p202
      %p204 = scmp.ne.s32.totalorder %s195, %s196
      %p205 = scmp.eq.s32.totalorder %s35, 0
      %p206 = por %p204, %p205
      %p207 = scmp.ne.s32.totalorder %s195, %s196
      %p208 = scmp.eq.s32.totalorder %s36, 1
      %p209 = por %p207, %p208
      %p211 = scmp.ne.s32.totalorder %s196, %s210
      %p212 = scmp.eq.s32.totalorder %s36, 0
      %p213 = por %p211, %p212
      %s215 = sadd.s32 %s214, 1
      %p218 = scmp.eq.s32.totalorder %s30, 1
      %p219 = scmp.ne.s32.totalorder %s214, %s216
      %p220 = scmp.eq.s32.totalorder %s30, 0
      %p221 = por %p219, %p220
      %p222 = scmp.ne.s32.totalorder %s214, %s216
      %p223 = scmp.eq.s32.totalorder %s35, 1
      %p224 = por %p222, %p223
      %p225 = scmp.ne.s32.totalorder %s216, %s217
      %p226 = scmp.eq.s32.totalorder %s35, 0
      %p227 = por %p225, %p226
      %p228 = scmp.ne.s32.totalorder %s216, %s217
      %p229 = scmp.eq.s32.totalorder %s36, 1
      %p230 = por %p228, %p229
      %p232 = scmp.ne.s32.totalorder %s217, %s231
      %p233 = scmp.eq.s32.totalorder %s36, 0
      %p234 = por %p232, %p233
      %s236 = sadd.s32 %s235, 1
      %p239 = scmp.eq.s32.totalorder %s30, 1
      %p240 = scmp.ne.s32.totalorder %s235, %s237
      %p241 = scmp.eq.s32.totalorder %s30, 0
      %p242 = por %p240, %p241
      %p243 = scmp.ne.s32.totalorder %s235, %s237
      %p244 = scmp.eq.s32.totalorder %s35, 1
      %p245 = por %p243, %p244
      %p246 = scmp.ne.s32.totalorder %s237, %s238
      %p247 = scmp.eq.s32.totalorder %s35, 0
      %p248 = por %p246, %p247
      %p249 = scmp.ne.s32.totalorder %s237, %s238
      %p250 = scmp.eq.s32.totalorder %s36, 1
      %p251 = por %p249, %p250
      %p253 = scmp.ne.s32.totalorder %s238, %s252
      %p254 = scmp.eq.s32.totalorder %s36, 0
      %p255 = por %p253, %p254
      %s257 = sadd.s32 %s256, 1
      %p260 = scmp.eq.s32.totalorder %s30, 1
      %p261 = scmp.ne.s32.totalorder %s256, %s258
      %p262 = scmp.eq.s32.totalorder %s30, 0
      %p263 = por %p261, %p262
      %p264 = scmp.ne.s32.totalorder %s256, %s258
      %p265 = scmp.eq.s32.totalorder %s35, 1
      %p266 = por %p264, %p265
      %p267 = scmp.ne.s32.totalorder %s258, %s259
      %p268 = scmp.eq.s32.totalorder %s35, 0
      %p269 = por %p267, %p268
      %p270 = scmp.ne.s32.totalorder %s258, %s259
      %p271 = scmp.eq.s32.totalorder %s36, 1
      %p272 = por %p270, %p271
      %p274 = scmp.ne.s32.totalorder %s259, %s273
      %p275 = scmp.eq.s32.totalorder %s36, 0
      %p276 = por %p274, %p275
      %s278 = sadd.s32 %s277, 1
      %p281 = scmp.eq.s32.totalorder %s30, 1
      %p282 = scmp.ne.s32.totalorder %s277, %s279
      %p283 = scmp.eq.s32.totalorder %s30, 0
      %p284 = por %p282, %p283
      %p285 = scmp.ne.s32.totalorder %s277, %s279
      %p286 = scmp.eq.s32.totalorder %s35, 1
      %p287 = por %p285, %p286
      %p288 = scmp.ne.s32.totalorder %s279, %s280
      %p289 = scmp.eq.s32.totalorder %s35, 0
      %p290 = por %p288, %p289
      %p291 = scmp.ne.s32.totalorder %s279, %s280
      %p292 = scmp.eq.s32.totalorder %s36, 1
      %p293 = por %p291, %p292
      %p295 = scmp.ne.s32.totalorder %s280, %s294
      %p296 = scmp.eq.s32.totalorder %s36, 0
      %p297 = por %p295, %p296
      %s298 = ssub.s32 %s37, %s49
      %s299 = ssub.s32 %s38, %s45
      %s300 = sor.u32 %s298, %s299
      %p301 = scmp.eq.s32.totalorder %s300, 0
      %s303 = sadd.s32 %s302, 1
      %s304 = scalar_select %p301, %s302, %s303
      %p307 = pneg %p301
      %p308 = scmp.eq.s32.totalorder %s30, 1
      %p309 = por %p307, %p308
      %p310 = scmp.ne.s32.totalorder %s302, %s305
      %p311 = scmp.eq.s32.totalorder %s30, 0
      %p312 = por %p310, %p311
      %p313 = scmp.ne.s32.totalorder %s302, %s305
      %p314 = scmp.eq.s32.totalorder %s35, 1
      %p315 = por %p313, %p314
      %p316 = scmp.ne.s32.totalorder %s305, %s306
      %p317 = scmp.eq.s32.totalorder %s35, 0
      %p318 = por %p316, %p317
      %p319 = scmp.ne.s32.totalorder %s305, %s306
      %p320 = scmp.eq.s32.totalorder %s36, 1
      %p321 = por %p319, %p320
      %p323 = scmp.ne.s32.totalorder %s306, %s322
      %p324 = scmp.eq.s32.totalorder %s36, 0
      %p325 = por %p323, %p324
      %p326 = scmp.le.s32.totalorder 1, %s30
      %p327 = scmp.lt.s32.totalorder %s30, 3
      %p328 = pnand %p326, %p327
      %p329 = pneg %p328
      // Predicated region
      $region9: #{tpu_custom_call.1} parent=5 // pred_check
        _
      $region10: #{tpu_custom_call.1} parent=5 // pred_check_branch
        %331 = sbr.rel (%p328) target = $region12
      $region11: #{tpu_custom_call.1} parent=5 // pred_region
        %s332 = ssub.s32 %s30, 1
        // Predicated region
        $region13: #{tpu_custom_call.1} parent=11 // pred_check
          %p333 = pneg %p143
        $region14: #{tpu_custom_call.1} parent=11 // pred_check_branch
          %335 = sbr.rel (%p333) target = $region16
        $region15: #{tpu_custom_call.1} parent=11 // pred_region
          %s337 = ssub.s32 256, 256
          %338 = vsyncadd [#allocation11], %s337
          %s339 = sshll.u32 [#allocation10], 4
          %s340 = int_to_ptr.vmem [resolvable:$true] %s339
          %345 = dma.hbm_to_vmem [thread:$0]  %s3, 256, %s340, [#allocation11], 64, 64, 4
        $region16: #{tpu_custom_call.1} parent=11 // pred_fallthru
          _
        // Predicated region
        $region17: #{tpu_custom_call.1} parent=11 // pred_check
          %p346 = pneg %p164
        $region18: #{tpu_custom_call.1} parent=11 // pred_check_branch
          %348 = sbr.rel (%p346) target = $region20
        $region19: #{tpu_custom_call.1} parent=11 // pred_region
          %s350 = ssub.s32 256, 256
          %351 = vsyncadd [#allocation11], %s350
          %s352 = sshll.u32 [#allocation12], 4
          %s353 = int_to_ptr.vmem [resolvable:$true] %s352
          %358 = dma.hbm_to_vmem [thread:$0]  %s4, 256, %s353, [#allocation11], 64, 64, 4
        $region20: #{tpu_custom_call.1} parent=11 // pred_fallthru
          _
        // Predicated region
        $region21: #{tpu_custom_call.1} parent=11 // pred_check
          %p359 = pneg %p185
        $region22: #{tpu_custom_call.1} parent=11 // pred_check_branch
          %361 = sbr.rel (%p359) target = $region24
        $region23: #{tpu_custom_call.1} parent=11 // pred_region
          %s363 = ssub.s32 256, 256
          %364 = vsyncadd [#allocation14], %s363
          %s365 = sshll.u32 [#allocation13], 4
          %s366 = int_to_ptr.vmem [resolvable:$true] %s365
          %371 = dma.hbm_to_vmem [thread:$0]  %s5, 256, %s366, [#allocation14], 64, 64, 4
        $region24: #{tpu_custom_call.1} parent=11 // pred_fallthru
          _
        // Predicated region
        $region25: #{tpu_custom_call.1} parent=11 // pred_check
          %p372 = pneg %p206
        $region26: #{tpu_custom_call.1} parent=11 // pred_check_branch
          %374 = sbr.rel (%p372) target = $region28
        $region27: #{tpu_custom_call.1} parent=11 // pred_region
          %s376 = ssub.s32 256, 256
          %377 = vsyncadd [#allocation14], %s376
          %s378 = sshll.u32 [#allocation15], 4
          %s379 = int_to_ptr.vmem [resolvable:$true] %s378
          %384 = dma.hbm_to_vmem [thread:$0]  %s6, 256, %s379, [#allocation14], 64, 64, 4
        $region28: #{tpu_custom_call.1} parent=11 // pred_fallthru
          _
        // Predicated region
        $region29: #{tpu_custom_call.1} parent=11 // pred_check
          %p385 = pneg %p227
        $region30: #{tpu_custom_call.1} parent=11 // pred_check_branch
          %387 = sbr.rel (%p385) target = $region32
        $region31: #{tpu_custom_call.1} parent=11 // pred_region
          %s389 = ssub.s32 16, 16
          %390 = vsyncadd [#allocation17], %s389
          %s392 = sshll.u32 [#allocation16], 4
          %s393 = int_to_ptr.vmem [resolvable:$true] %s392
          %395 = dma.hbm_to_vmem [thread:$0]  %s7, 16, %s393, [#allocation17]
        $region32: #{tpu_custom_call.1} parent=11 // pred_fallthru
          _
        // Predicated region
        $region33: #{tpu_custom_call.1} parent=11 // pred_check
          %p396 = pneg %p248
        $region34: #{tpu_custom_call.1} parent=11 // pred_check_branch
          %398 = sbr.rel (%p396) target = $region36
        $region35: #{tpu_custom_call.1} parent=11 // pred_region
          %s400 = ssub.s32 16, 16
          %401 = vsyncadd [#allocation17], %s400
          %s403 = sshll.u32 [#allocation18], 4
          %s404 = int_to_ptr.vmem [resolvable:$true] %s403
          %406 = dma.hbm_to_vmem [thread:$0]  %s8, 16, %s404, [#allocation17]
        $region36: #{tpu_custom_call.1} parent=11 // pred_fallthru
          _
        // Predicated region
        $region37: #{tpu_custom_call.1} parent=11 // pred_check
          %p407 = pneg %p269
        $region38: #{tpu_custom_call.1} parent=11 // pred_check_branch
          %409 = sbr.rel (%p407) target = $region40
        $region39: #{tpu_custom_call.1} parent=11 // pred_region
          %s411 = ssub.s32 16, 16
          %412 = vsyncadd [#allocation20], %s411
          %s414 = sshll.u32 [#allocation19], 4
          %s415 = int_to_ptr.vmem [resolvable:$true] %s414
          %417 = dma.hbm_to_vmem [thread:$0]  %s9, 16, %s415, [#allocation20]
        $region40: #{tpu_custom_call.1} parent=11 // pred_fallthru
          _
        // Predicated region
        $region41: #{tpu_custom_call.1} parent=11 // pred_check
          %p418 = pneg %p290
        $region42: #{tpu_custom_call.1} parent=11 // pred_check_branch
          %420 = sbr.rel (%p418) target = $region44
        $region43: #{tpu_custom_call.1} parent=11 // pred_region
          %s422 = ssub.s32 16, 16
          %423 = vsyncadd [#allocation20], %s422
          %s425 = sshll.u32 [#allocation21], 4
          %s426 = int_to_ptr.vmem [resolvable:$true] %s425
          %428 = dma.hbm_to_vmem [thread:$0]  %s10, 16, %s426, [#allocation20]
        $region44: #{tpu_custom_call.1} parent=11 // pred_fallthru
          _
      $region12: #{tpu_custom_call.1} parent=5 // pred_fallthru
        _
      %p429 = scmp.lt.s32.totalorder %s30, 2
      // Predicated region
      $region45: #{tpu_custom_call.1} parent=5 // pred_check
        %p430 = pneg %p429
      $region46: #{tpu_custom_call.1} parent=5 // pred_check_branch
        %432 = sbr.rel (%p430) target = $region48
      $region47: #{tpu_custom_call.1} parent=5 // pred_region
        // Predicated region
        $region49: #{tpu_custom_call.1} parent=47 // pred_check
          %p433 = pneg %p64
        $region50: #{tpu_custom_call.1} parent=47 // pred_check_branch
          %435 = sbr.rel (%p433) target = $region52
        $region51: #{tpu_custom_call.1} parent=47 // pred_region
          %s436 = sand.u32 %s54, 1
          %s437 = scalar_lea.sflag [#allocation5], %s436
          %s438 = sand.u32 %s54, 1
          %s439 = smul.addr %s438, 4
          %s440 = scalar_lea.vmem [#allocation4], %s439
          %s442 = ssub.s32 64, 64
          %443 = vsyncadd %s437, %s442
          %s444 = sadd.s32 %s38, %s37
          %s445 = smul.addr %s444, 64
          %s446 = scalar_lea.hbm %s0, %s445
          %s448 = sshll.u32 %s440, 4
          %s449 = int_to_ptr.vmem [resolvable:$true] %s448
          %451 = dma.hbm_to_vmem [thread:$0]  %s446, 64, %s449, %s437
        $region52: #{tpu_custom_call.1} parent=47 // pred_fallthru
          _
        // Predicated region
        $region53: #{tpu_custom_call.1} parent=47 // pred_check
          %p452 = pneg %p90
        $region54: #{tpu_custom_call.1} parent=47 // pred_check_branch
          %454 = sbr.rel (%p452) target = $region56
        $region55: #{tpu_custom_call.1} parent=47 // pred_region
          %s455 = sand.u32 %s30, 1
          %s456 = scalar_lea.sflag [#allocation8], %s455
          %s457 = sand.u32 %s80, 1
          %s458 = smul.addr %s457, 4
          %s459 = scalar_lea.vmem [#allocation7], %s458
          %s461 = ssub.s32 64, 64
          %462 = vsyncadd %s456, %s461
          %s463 = smul.addr %s37, 64
          %s464 = scalar_lea.hbm %s1, %s463
          %s466 = sshll.u32 %s459, 4
          %s467 = int_to_ptr.vmem [resolvable:$true] %s466
          %469 = dma.hbm_to_vmem [thread:$0]  %s464, 64, %s467, %s456
        $region56: #{tpu_custom_call.1} parent=47 // pred_fallthru
          _
        // Predicated region
        $region57: #{tpu_custom_call.1} parent=47 // pred_check
          %p470 = pneg %p116
        $region58: #{tpu_custom_call.1} parent=47 // pred_check_branch
          %472 = sbr.rel (%p470) target = $region60
        $region59: #{tpu_custom_call.1} parent=47 // pred_region
          %s473 = sand.u32 %s30, 1
          %s474 = scalar_lea.sflag [#allocation8], %s473
          %s475 = sand.u32 %s106, 1
          %s476 = smul.addr %s475, 4
          %s477 = scalar_lea.vmem [#allocation9], %s476
          %s479 = ssub.s32 64, 64
          %480 = vsyncadd %s474, %s479
          %s481 = smul.addr %s37, 64
          %s482 = scalar_lea.hbm %s2, %s481
          %s484 = sshll.u32 %s477, 4
          %s485 = int_to_ptr.vmem [resolvable:$true] %s484
          %487 = dma.hbm_to_vmem [thread:$0]  %s482, 64, %s485, %s474
        $region60: #{tpu_custom_call.1} parent=47 // pred_fallthru
          _
      $region48: #{tpu_custom_call.1} parent=5 // pred_fallthru
        _
      %p488 = scmp.le.s32.totalorder 1, %s30
      %p489 = scmp.lt.s32.totalorder %s30, 3
      %p490 = pnand %p488, %p489
      %p491 = pneg %p490
      // Predicated region
      $region61: #{tpu_custom_call.1} parent=5 // pred_check
        _
      $region62: #{tpu_custom_call.1} parent=5 // pred_check_branch
        %493 = sbr.rel (%p490) target = $region64
      $region63: #{tpu_custom_call.1} parent=5 // pred_region
        %s494 = ssub.s32 %s30, 1
        %s495 = sand.u32 %s57, 1
        %s496 = scalar_lea.sflag [#allocation5], %s495
        %s497 = sand.u32 %s57, 1
        %s498 = smul.addr %s497, 4
        %s499 = scalar_lea.vmem [#allocation4], %s498
        // Predicated region
        $region65: #{tpu_custom_call.1} parent=63 // pred_check
          %p500 = pneg %p70
        $region66: #{tpu_custom_call.1} parent=63 // pred_check_branch
          %502 = sbr.rel (%p500) target = $region68
        $region67: #{tpu_custom_call.1} parent=63 // pred_region
          %503 = dma.done %s496, 64
        $region68: #{tpu_custom_call.1} parent=63 // pred_fallthru
          _
        %s504 = sand.u32 %s35, 1
        %s505 = scalar_lea.sflag [#allocation8], %s504
        %s506 = sand.u32 %s83, 1
        %s507 = smul.addr %s506, 4
        %s508 = scalar_lea.vmem [#allocation7], %s507
        // Predicated region
        $region69: #{tpu_custom_call.1} parent=63 // pred_check
          %p509 = pneg %p96
        $region70: #{tpu_custom_call.1} parent=63 // pred_check_branch
          %511 = sbr.rel (%p509) target = $region72
        $region71: #{tpu_custom_call.1} parent=63 // pred_region
          %512 = dma.done %s505, 64
        $region72: #{tpu_custom_call.1} parent=63 // pred_fallthru
          _
        %s513 = sand.u32 %s35, 1
        %s514 = scalar_lea.sflag [#allocation8], %s513
        %s515 = sand.u32 %s109, 1
        %s516 = smul.addr %s515, 4
        %s517 = scalar_lea.vmem [#allocation9], %s516
        // Predicated region
        $region73: #{tpu_custom_call.1} parent=63 // pred_check
          %p518 = pneg %p122
        $region74: #{tpu_custom_call.1} parent=63 // pred_check_branch
          %520 = sbr.rel (%p518) target = $region76
        $region75: #{tpu_custom_call.1} parent=63 // pred_region
          %521 = dma.done %s514, 64
        $region76: #{tpu_custom_call.1} parent=63 // pred_fallthru
          _
        // Predicated region
        $region77: #{tpu_custom_call.1} parent=63 // pred_check
          %p522 = pneg %p143
        $region78: #{tpu_custom_call.1} parent=63 // pred_check_branch
          %524 = sbr.rel (%p522) target = $region80
        $region79: #{tpu_custom_call.1} parent=63 // pred_region
          %525 = dma.done [#allocation11], 256
        $region80: #{tpu_custom_call.1} parent=63 // pred_fallthru
          _
        // Predicated region
        $region81: #{tpu_custom_call.1} parent=63 // pred_check
          %p526 = pneg %p164
        $region82: #{tpu_custom_call.1} parent=63 // pred_check_branch
          %528 = sbr.rel (%p526) target = $region84
        $region83: #{tpu_custom_call.1} parent=63 // pred_region
          %529 = dma.done [#allocation11], 256
        $region84: #{tpu_custom_call.1} parent=63 // pred_fallthru
          _
        // Predicated region
        $region85: #{tpu_custom_call.1} parent=63 // pred_check
          %p530 = pneg %p185
        $region86: #{tpu_custom_call.1} parent=63 // pred_check_branch
          %532 = sbr.rel (%p530) target = $region88
        $region87: #{tpu_custom_call.1} parent=63 // pred_region
          %533 = dma.done [#allocation14], 256
        $region88: #{tpu_custom_call.1} parent=63 // pred_fallthru
          _
        // Predicated region
        $region89: #{tpu_custom_call.1} parent=63 // pred_check
          %p534 = pneg %p206
        $region90: #{tpu_custom_call.1} parent=63 // pred_check_branch
          %536 = sbr.rel (%p534) target = $region92
        $region91: #{tpu_custom_call.1} parent=63 // pred_region
          %537 = dma.done [#allocation14], 256
        $region92: #{tpu_custom_call.1} parent=63 // pred_fallthru
          _
        // Predicated region
        $region93: #{tpu_custom_call.1} parent=63 // pred_check
          %p538 = pneg %p227
        $region94: #{tpu_custom_call.1} parent=63 // pred_check_branch
          %540 = sbr.rel (%p538) target = $region96
        $region95: #{tpu_custom_call.1} parent=63 // pred_region
          %541 = dma.done [#allocation17], 16
        $region96: #{tpu_custom_call.1} parent=63 // pred_fallthru
          _
        // Predicated region
        $region97: #{tpu_custom_call.1} parent=63 // pred_check
          %p542 = pneg %p248
        $region98: #{tpu_custom_call.1} parent=63 // pred_check_branch
          %544 = sbr.rel (%p542) target = $region100
        $region99: #{tpu_custom_call.1} parent=63 // pred_region
          %545 = dma.done [#allocation17], 16
        $region100: #{tpu_custom_call.1} parent=63 // pred_fallthru
          _
        // Predicated region
        $region101: #{tpu_custom_call.1} parent=63 // pred_check
          %p546 = pneg %p269
        $region102: #{tpu_custom_call.1} parent=63 // pred_check_branch
          %548 = sbr.rel (%p546) target = $region104
        $region103: #{tpu_custom_call.1} parent=63 // pred_region
          %549 = dma.done [#allocation20], 16
        $region104: #{tpu_custom_call.1} parent=63 // pred_fallthru
          _
        // Predicated region
        $region105: #{tpu_custom_call.1} parent=63 // pred_check
          %p550 = pneg %p290
        $region106: #{tpu_custom_call.1} parent=63 // pred_check_branch
          %552 = sbr.rel (%p550) target = $region108
        $region107: #{tpu_custom_call.1} parent=63 // pred_region
          %553 = dma.done [#allocation20], 16
        $region108: #{tpu_custom_call.1} parent=63 // pred_fallthru
          _
        %s554 = sand.u32 %s57, 1
        %s555 = scalar_lea.sflag [#allocation5], %s554
        %s556 = sand.u32 %s57, 1
        %s557 = smul.addr %s556, 4
        %s558 = scalar_lea.vmem [#allocation4], %s557
        %p559 = pneg %p70
        %p560 = pneg %p67
        %s561 = sand.u32 %s35, 1
        %s562 = scalar_lea.sflag [#allocation8], %s561
        %s563 = sand.u32 %s83, 1
        %s564 = smul.addr %s563, 4
        %s565 = scalar_lea.vmem [#allocation7], %s564
        %p566 = pneg %p96
        %p567 = pneg %p93
        %s568 = sand.u32 %s35, 1
        %s569 = scalar_lea.sflag [#allocation8], %s568
        %s570 = sand.u32 %s109, 1
        %s571 = smul.addr %s570, 4
        %s572 = scalar_lea.vmem [#allocation9], %s571
        %p573 = pneg %p122
        %p574 = pneg %p119
        %p575 = pneg %p143
        %p576 = pneg %p140
        %p577 = pneg %p164
        %p578 = pneg %p161
        %p579 = pneg %p185
        %p580 = pneg %p182
        %p581 = pneg %p206
        %p582 = pneg %p203
        %p583 = pneg %p227
        %p584 = pneg %p224
        %p585 = pneg %p248
        %p586 = pneg %p245
        %p587 = pneg %p269
        %p588 = pneg %p266
        %p589 = pneg %p290
        %p590 = pneg %p287
        %p591 = pneg %p318
        %p592 = pneg %p315
        %s593 = sand.u32 %s305, 1
        %s594 = scalar_lea.sflag [#allocation6], %s593
        %s595 = sand.u32 %s305, 1
        %s596 = smul.addr %s595, 8
        %s597 = scalar_lea.vmem [#allocation22], %s596
        %p599 = scmp.eq.s32.totalorder %s40, 0
        // Predicated region
        $region109: #{tpu_custom_call.1} parent=63 // pred_check
          %p600 = pneg %p599
        $region110: #{tpu_custom_call.1} parent=63 // pred_check_branch
          %602 = sbr.rel (%p600) target = $region112
        $region111: #{tpu_custom_call.1} parent=63 // pred_region
          %v603 = vld [vmem:[%s508] sm:$0xf]
          %v604 = vld [vmem:[%s517] sm:$0xf]
          %v605 = vld [vmem:[#allocation12] sm:$0xf]
          %v606 = vld [vmem:[#allocation12 + $0x4] sm:$0xf]
          %v607 = vld [vmem:[#allocation12 + $0x8] sm:$0xf]
          %v608 = vld [vmem:[#allocation12 + $0xc] sm:$0xf]
          %v609 = vld [vmem:[#allocation18] sm:$0x1]
          %v611 = vlaneseq
          %v612 = vshrl.u32 %v611, 7
          %v613 = vsub.s32 0, %v612
          %v614 = vrot.slane %v609, %v613
          %v620 = vunpack.c.l.b16 %v605
          %v621 = vunpack.c.l.b16 %v606
          %v622 = vunpack.c.l.b16 %v607
          %v623 = vunpack.c.l.b16 %v608
          %v624 = vpack.c.b16 %v621, %v620
          %v625 = vpack.c.b16 %v623, %v622
          %vm628 = vcmask 261120
          %v630 = vsel %vm628, %v603, 0
          %632 = vmatprep.subr.bf16.mxu0 0
          %633 = vmatpush1.bf16.msra.mxu0 %v624
          %634 = vmatprep.subr.bf16.mxu0 0
          %635 = vmatpush1.bf16.msra.mxu0 %v625
          %636 = vmatprep.subr.bf16.mxu0 0
          %637 = vmatpush1.bf16.msra.mxu0 0
          %638 = vmatprep.subr.bf16.mxu0 0
          %639 = vmatpush1.bf16.msra.mxu0 0
          %640 = vmatprep.subr.bf16.mxu0 0
          %641 = vmatpush1.bf16.msra.mxu0 0
          %642 = vmatprep.subr.bf16.mxu0 0
          %643 = vmatpush1.bf16.msra.mxu0 0
          %644 = vmatprep.subr.bf16.mxu0 0
          %645 = vmatpush1.bf16.msra.mxu0 0
          %646 = vmatprep.subr.bf16.mxu0 0
          %647 = vmatpush1.bf16.msra.mxu0 0
          %648 = vmatprep.subr.bf16.mxu0 0
          %649 = vmatpush1.bf16.msra.mxu0 0
          %650 = vmatprep.subr.bf16.mxu0 0
          %651 = vmatpush1.bf16.msra.mxu0 0
          %652 = vmatprep.subr.bf16.mxu0 0
          %653 = vmatpush1.bf16.msra.mxu0 0
          %654 = vmatprep.subr.bf16.mxu0 0
          %655 = vmatpush1.bf16.msra.mxu0 0
          %656 = vmatprep.subr.bf16.mxu0 0
          %657 = vmatpush1.bf16.msra.mxu0 0
          %658 = vmatprep.subr.bf16.mxu0 0
          %659 = vmatpush1.bf16.msra.mxu0 0
          %660 = vmatprep.subr.bf16.mxu0 0
          %661 = vmatpush1.bf16.msra.mxu0 0
          %662 = vmatprep.subr.bf16.mxu0 0
          %663 = vmatpush1.bf16.msra.mxu0 0
          %664 = vmatprep.mubr.bf16.mxu0 0
          %665 = vmatmul.mubr.bf16.gmra.mrb[0].mxu0 %v630
          %v666 = vpop.f32.mrb[0].mxu0
          %v667 = vadd.f32 %v614, %v666
          %v668 = vpop.f32.mrb[0].mxu0
          %v669 = vpop.f32.mrb[0].mxu0
          %v670 = vpop.f32.mrb[0].mxu0
          %671 = vdwg.mxu0
          %v672 = vld [vmem:[#allocation13] sm:$0xf]
          %v673 = vld [vmem:[#allocation13 + $0x4] sm:$0xf]
          %v674 = vld [vmem:[#allocation13 + $0x8] sm:$0xf]
          %v675 = vld [vmem:[#allocation13 + $0xc] sm:$0xf]
          %v676 = vld [vmem:[#allocation19] sm:$0x1]
          %v678 = vlaneseq
          %v679 = vshrl.u32 %v678, 7
          %v680 = vsub.s32 0, %v679
          %v681 = vrot.slane %v676, %v680
          %v687 = vunpack.c.l.b16 %v672
          %v688 = vunpack.c.l.b16 %v673
          %v689 = vunpack.c.l.b16 %v674
          %v690 = vunpack.c.l.b16 %v675
          %v691 = vpack.c.b16 %v688, %v687
          %v692 = vpack.c.b16 %v690, %v689
          %v696 = vsel %vm628, %v604, 0
          %698 = vmatprep.subr.bf16.mxu0 0
          %699 = vmatpush1.bf16.msra.mxu0 %v691
          %700 = vmatprep.subr.bf16.mxu0 0
          %701 = vmatpush1.bf16.msra.mxu0 %v692
          %702 = vmatprep.subr.bf16.mxu0 0
          %703 = vmatpush1.bf16.msra.mxu0 0
          %704 = vmatprep.subr.bf16.mxu0 0
          %705 = vmatpush1.bf16.msra.mxu0 0
          %706 = vmatprep.subr.bf16.mxu0 0
          %707 = vmatpush1.bf16.msra.mxu0 0
          %708 = vmatprep.subr.bf16.mxu0 0
          %709 = vmatpush1.bf16.msra.mxu0 0
          %710 = vmatprep.subr.bf16.mxu0 0
          %711 = vmatpush1.bf16.msra.mxu0 0
          %712 = vmatprep.subr.bf16.mxu0 0
          %713 = vmatpush1.bf16.msra.mxu0 0
          %714 = vmatprep.subr.bf16.mxu0 0
          %715 = vmatpush1.bf16.msra.mxu0 0
          %716 = vmatprep.subr.bf16.mxu0 0
          %717 = vmatpush1.bf16.msra.mxu0 0
          %718 = vmatprep.subr.bf16.mxu0 0
          %719 = vmatpush1.bf16.msra.mxu0 0
          %720 = vmatprep.subr.bf16.mxu0 0
          %721 = vmatpush1.bf16.msra.mxu0 0
          %722 = vmatprep.subr.bf16.mxu0 0
          %723 = vmatpush1.bf16.msra.mxu0 0
          %724 = vmatprep.subr.bf16.mxu0 0
          %725 = vmatpush1.bf16.msra.mxu0 0
          %726 = vmatprep.subr.bf16.mxu0 0
          %727 = vmatpush1.bf16.msra.mxu0 0
          %728 = vmatprep.subr.bf16.mxu0 0
          %729 = vmatpush1.bf16.msra.mxu0 0
          %730 = vmatprep.mubr.bf16.mxu0 0
          %731 = vmatmul.mubr.bf16.gmra.mrb[0].mxu0 %v696
          %v732 = vpop.f32.mrb[0].mxu0
          %v733 = vadd.f32 %v681, %v732
          %v734 = vpop.f32.mrb[0].mxu0
          %v735 = vpop.f32.mrb[0].mxu0
          %v736 = vpop.f32.mrb[0].mxu0
          %737 = vdwg.mxu0
          %739 = vrot.lane.b32.xlu0 %v667, 120
          %v740 = vpop.permute.xlu0 %739
          %742 = vrot.lane.b32.xlu0 %v667, 112
          %v743 = vpop.permute.xlu0 %742
          %745 = vrot.lane.b32.xlu0 %v667, 104
          %v746 = vpop.permute.xlu0 %745
          %v748 = vcombine.low %v667, %v743
          %v749 = vcombine.high %v667, %v743
          %v751 = vunpack.c.l.s4 1983009808
          %v752 = vunpack.c.0.s8 %v751
          %v753 = vlaneseq
          %v754 = vshrl.u32 %v753, 7
          %v755 = vsub.s32 %v752, %v754
          %v756 = vrot.slane %v748, %v755
          %v758 = vunpack.c.l.s4 1983009808
          %v759 = vunpack.c.0.s8 %v758
          %v760 = vlaneseq
          %v761 = vshrl.u32 %v760, 7
          %v762 = vsub.s32 %v759, %v761
          %v763 = vrot.slane %v749, %v762
          %v764 = vcombine.low %v740, %v746
          %v765 = vcombine.high %v740, %v746
          %v767 = vunpack.c.l.s4 1983009808
          %v768 = vunpack.c.0.s8 %v767
          %v769 = vlaneseq
          %v770 = vshrl.u32 %v769, 7
          %v771 = vsub.s32 %v768, %v770
          %v772 = vrot.slane %v764, %v771
          %v774 = vunpack.c.l.s4 1983009808
          %v775 = vunpack.c.0.s8 %v774
          %v776 = vlaneseq
          %v777 = vshrl.u32 %v776, 7
          %v778 = vsub.s32 %v775, %v777
          %v779 = vrot.slane %v765, %v778
          %v780 = vcombine.low %v756, %v772
          %v781 = vcombine.high %v756, %v772
          %v783 = vunpack.c.l.s4 1934713408
          %v784 = vunpack.c.0.s8 %v783
          %v785 = vlaneseq
          %v786 = vshrl.u32 %v785, 7
          %v787 = vsub.s32 %v784, %v786
          %v788 = vrot.slane %v780, %v787
          %v790 = vunpack.c.l.s4 1934713408
          %v791 = vunpack.c.0.s8 %v790
          %v792 = vlaneseq
          %v793 = vshrl.u32 %v792, 7
          %v794 = vsub.s32 %v791, %v793
          %v795 = vrot.slane %v781, %v794
          %v796 = vcombine.low %v763, %v779
          %v797 = vcombine.high %v763, %v779
          %v799 = vunpack.c.l.s4 1934713408
          %v800 = vunpack.c.0.s8 %v799
          %v801 = vlaneseq
          %v802 = vshrl.u32 %v801, 7
          %v803 = vsub.s32 %v800, %v802
          %v804 = vrot.slane %v796, %v803
          %v806 = vunpack.c.l.s4 1934713408
          %v807 = vunpack.c.0.s8 %v806
          %v808 = vlaneseq
          %v809 = vshrl.u32 %v808, 7
          %v810 = vsub.s32 %v807, %v809
          %v811 = vrot.slane %v797, %v810
          %v812 = vcombine.high %v788, 0.0
          %v813 = vcombine.high %v795, 0.0
          %v814 = vcombine.high %v804, 0.0
          %v815 = vcombine.high %v811, 0.0
          %v816 = vcombine.low %v788, %v795
          %v818 = vunpack.c.l.s4 1983009808
          %v819 = vunpack.c.0.s8 %v818
          %v820 = vlaneseq
          %v821 = vshrl.u32 %v820, 7
          %v822 = vsub.s32 %v819, %v821
          %v823 = vrot.slane %v816, %v822
          %v824 = vcombine.low %v812, %v813
          %v826 = vunpack.c.l.s4 1983009808
          %v827 = vunpack.c.0.s8 %v826
          %v828 = vlaneseq
          %v829 = vshrl.u32 %v828, 7
          %v830 = vsub.s32 %v827, %v829
          %v831 = vrot.slane %v824, %v830
          %v832 = vcombine.low %v804, %v811
          %v834 = vunpack.c.l.s4 1983009808
          %v835 = vunpack.c.0.s8 %v834
          %v836 = vlaneseq
          %v837 = vshrl.u32 %v836, 7
          %v838 = vsub.s32 %v835, %v837
          %v839 = vrot.slane %v832, %v838
          %v840 = vcombine.low %v814, %v815
          %v842 = vunpack.c.l.s4 1983009808
          %v843 = vunpack.c.0.s8 %v842
          %v844 = vlaneseq
          %v845 = vshrl.u32 %v844, 7
          %v846 = vsub.s32 %v843, %v845
          %v847 = vrot.slane %v840, %v846
          %v848 = vcombine.low %v823, %v831
          %v849 = vcombine.high %v823, %v831
          %v851 = vunpack.c.l.s4 1934713408
          %v852 = vunpack.c.0.s8 %v851
          %v853 = vlaneseq
          %v854 = vshrl.u32 %v853, 7
          %v855 = vsub.s32 %v852, %v854
          %v856 = vrot.slane %v848, %v855
          %v858 = vunpack.c.l.s4 1934713408
          %v859 = vunpack.c.0.s8 %v858
          %v860 = vlaneseq
          %v861 = vshrl.u32 %v860, 7
          %v862 = vsub.s32 %v859, %v861
          %v863 = vrot.slane %v849, %v862
          %v864 = vcombine.low %v839, %v847
          %v865 = vcombine.high %v839, %v847
          %v867 = vunpack.c.l.s4 1934713408
          %v868 = vunpack.c.0.s8 %v867
          %v869 = vlaneseq
          %v870 = vshrl.u32 %v869, 7
          %v871 = vsub.s32 %v868, %v870
          %v872 = vrot.slane %v864, %v871
          %v874 = vunpack.c.l.s4 1934713408
          %v875 = vunpack.c.0.s8 %v874
          %v876 = vlaneseq
          %v877 = vshrl.u32 %v876, 7
          %v878 = vsub.s32 %v875, %v877
          %v879 = vrot.slane %v865, %v878
          %v880 = vcombine.low %v856, %v872
          %v881 = vcombine.high %v856, %v872
          %v882 = vcombine.low %v863, %v879
          %v883 = vcombine.high %v863, %v879
          %v884 = vpack.c.bf16 %v880, %v880
          %v885 = vpack.c.bf16 %v881, %v881
          %v886 = vpack.c.bf16 %v882, %v882
          %v887 = vpack.c.bf16 %v883, %v883
          %vm888 = vcmask 60416
          %889 = vst.msk [vmem:[#allocation2] sm:$0xf] %vm888, %v884
          %890 = vst.msk [vmem:[#allocation2 + $0x4] sm:$0xf] %vm888, %v885
          %891 = vst.msk [vmem:[#allocation2 + $0x8] sm:$0xf] %vm888, %v886
          %892 = vst.msk [vmem:[#allocation2 + $0xc] sm:$0xf] %vm888, %v887
          %894 = vrot.lane.b32.xlu0 %v733, 120
          %v895 = vpop.permute.xlu0 %894
          %897 = vrot.lane.b32.xlu0 %v733, 112
          %v898 = vpop.permute.xlu0 %897
          %900 = vrot.lane.b32.xlu0 %v733, 104
          %v901 = vpop.permute.xlu0 %900
          %v903 = vcombine.low %v733, %v898
          %v904 = vcombine.high %v733, %v898
          %v906 = vunpack.c.l.s4 1983009808
          %v907 = vunpack.c.0.s8 %v906
          %v908 = vlaneseq
          %v909 = vshrl.u32 %v908, 7
          %v910 = vsub.s32 %v907, %v909
          %v911 = vrot.slane %v903, %v910
          %v913 = vunpack.c.l.s4 1983009808
          %v914 = vunpack.c.0.s8 %v913
          %v915 = vlaneseq
          %v916 = vshrl.u32 %v915, 7
          %v917 = vsub.s32 %v914, %v916
          %v918 = vrot.slane %v904, %v917
          %v919 = vcombine.low %v895, %v901
          %v920 = vcombine.high %v895, %v901
          %v922 = vunpack.c.l.s4 1983009808
          %v923 = vunpack.c.0.s8 %v922
          %v924 = vlaneseq
          %v925 = vshrl.u32 %v924, 7
          %v926 = vsub.s32 %v923, %v925
          %v927 = vrot.slane %v919, %v926
          %v929 = vunpack.c.l.s4 1983009808
          %v930 = vunpack.c.0.s8 %v929
          %v931 = vlaneseq
          %v932 = vshrl.u32 %v931, 7
          %v933 = vsub.s32 %v930, %v932
          %v934 = vrot.slane %v920, %v933
          %v935 = vcombine.low %v911, %v927
          %v936 = vcombine.high %v911, %v927
          %v938 = vunpack.c.l.s4 1934713408
          %v939 = vunpack.c.0.s8 %v938
          %v940 = vlaneseq
          %v941 = vshrl.u32 %v940, 7
          %v942 = vsub.s32 %v939, %v941
          %v943 = vrot.slane %v935, %v942
          %v945 = vunpack.c.l.s4 1934713408
          %v946 = vunpack.c.0.s8 %v945
          %v947 = vlaneseq
          %v948 = vshrl.u32 %v947, 7
          %v949 = vsub.s32 %v946, %v948
          %v950 = vrot.slane %v936, %v949
          %v951 = vcombine.low %v918, %v934
          %v952 = vcombine.high %v918, %v934
          %v954 = vunpack.c.l.s4 1934713408
          %v955 = vunpack.c.0.s8 %v954
          %v956 = vlaneseq
          %v957 = vshrl.u32 %v956, 7
          %v958 = vsub.s32 %v955, %v957
          %v959 = vrot.slane %v951, %v958
          %v961 = vunpack.c.l.s4 1934713408
          %v962 = vunpack.c.0.s8 %v961
          %v963 = vlaneseq
          %v964 = vshrl.u32 %v963, 7
          %v965 = vsub.s32 %v962, %v964
          %v966 = vrot.slane %v952, %v965
          %v967 = vcombine.high %v943, 0.0
          %v968 = vcombine.high %v950, 0.0
          %v969 = vcombine.high %v959, 0.0
          %v970 = vcombine.high %v966, 0.0
          %v971 = vcombine.low %v943, %v950
          %v973 = vunpack.c.l.s4 1983009808
          %v974 = vunpack.c.0.s8 %v973
          %v975 = vlaneseq
          %v976 = vshrl.u32 %v975, 7
          %v977 = vsub.s32 %v974, %v976
          %v978 = vrot.slane %v971, %v977
          %v979 = vcombine.low %v967, %v968
          %v981 = vunpack.c.l.s4 1983009808
          %v982 = vunpack.c.0.s8 %v981
          %v983 = vlaneseq
          %v984 = vshrl.u32 %v983, 7
          %v985 = vsub.s32 %v982, %v984
          %v986 = vrot.slane %v979, %v985
          %v987 = vcombine.low %v959, %v966
          %v989 = vunpack.c.l.s4 1983009808
          %v990 = vunpack.c.0.s8 %v989
          %v991 = vlaneseq
          %v992 = vshrl.u32 %v991, 7
          %v993 = vsub.s32 %v990, %v992
          %v994 = vrot.slane %v987, %v993
          %v995 = vcombine.low %v969, %v970
          %v997 = vunpack.c.l.s4 1983009808
          %v998 = vunpack.c.0.s8 %v997
          %v999 = vlaneseq
          %v1000 = vshrl.u32 %v999, 7
          %v1001 = vsub.s32 %v998, %v1000
          %v1002 = vrot.slane %v995, %v1001
          %v1003 = vcombine.low %v978, %v986
          %v1004 = vcombine.high %v978, %v986
          %v1006 = vunpack.c.l.s4 1934713408
          %v1007 = vunpack.c.0.s8 %v1006
          %v1008 = vlaneseq
          %v1009 = vshrl.u32 %v1008, 7
          %v1010 = vsub.s32 %v1007, %v1009
          %v1011 = vrot.slane %v1003, %v1010
          %v1013 = vunpack.c.l.s4 1934713408
          %v1014 = vunpack.c.0.s8 %v1013
          %v1015 = vlaneseq
          %v1016 = vshrl.u32 %v1015, 7
          %v1017 = vsub.s32 %v1014, %v1016
          %v1018 = vrot.slane %v1004, %v1017
          %v1019 = vcombine.low %v994, %v1002
          %v1020 = vcombine.high %v994, %v1002
          %v1022 = vunpack.c.l.s4 1934713408
          %v1023 = vunpack.c.0.s8 %v1022
          %v1024 = vlaneseq
          %v1025 = vshrl.u32 %v1024, 7
          %v1026 = vsub.s32 %v1023, %v1025
          %v1027 = vrot.slane %v1019, %v1026
          %v1029 = vunpack.c.l.s4 1934713408
          %v1030 = vunpack.c.0.s8 %v1029
          %v1031 = vlaneseq
          %v1032 = vshrl.u32 %v1031, 7
          %v1033 = vsub.s32 %v1030, %v1032
          %v1034 = vrot.slane %v1020, %v1033
          %v1035 = vcombine.low %v1011, %v1027
          %v1036 = vcombine.high %v1011, %v1027
          %v1037 = vcombine.low %v1018, %v1034
          %v1038 = vcombine.high %v1018, %v1034
          %v1039 = vpack.c.bf16 %v1035, %v1035
          %v1040 = vpack.c.bf16 %v1036, %v1036
          %v1041 = vpack.c.bf16 %v1037, %v1037
          %v1042 = vpack.c.bf16 %v1038, %v1038
          %1043 = vst.msk [vmem:[#allocation3] sm:$0xf] %vm888, %v1039
          %1044 = vst.msk [vmem:[#allocation3 + $0x4] sm:$0xf] %vm888, %v1040
          %1045 = vst.msk [vmem:[#allocation3 + $0x8] sm:$0xf] %vm888, %v1041
          %1046 = vst.msk [vmem:[#allocation3 + $0xc] sm:$0xf] %vm888, %v1042
        $region112: #{tpu_custom_call.1} parent=63 // pred_fallthru
          _
        %v1047 = vld [vmem:[%s499] sm:$0xf]
        %v1048 = vld [vmem:[#allocation10] sm:$0xf]
        %v1049 = vld [vmem:[#allocation10 + $0x4] sm:$0xf]
        %v1050 = vld [vmem:[#allocation10 + $0x8] sm:$0xf]
        %v1051 = vld [vmem:[#allocation10 + $0xc] sm:$0xf]
        %v1052 = vld [vmem:[#allocation16] sm:$0x1]
        %v1054 = vlaneseq
        %v1055 = vshrl.u32 %v1054, 7
        %v1056 = vsub.s32 0, %v1055
        %v1057 = vrot.slane %v1052, %v1056
        %v1063 = vunpack.c.l.b16 %v1048
        %v1064 = vunpack.c.l.b16 %v1049
        %v1065 = vunpack.c.l.b16 %v1050
        %v1066 = vunpack.c.l.b16 %v1051
        %v1067 = vpack.c.b16 %v1064, %v1063
        %v1068 = vpack.c.b16 %v1066, %v1065
        %vm1071 = vcmask 261120
        %v1073 = vsel %vm1071, %v1047, 0
        %1075 = vmatprep.subr.bf16.mxu0 0
        %1076 = vmatpush1.bf16.msra.mxu0 %v1067
        %1077 = vmatprep.subr.bf16.mxu0 0
        %1078 = vmatpush1.bf16.msra.mxu0 %v1068
        %1079 = vmatprep.subr.bf16.mxu0 0
        %1080 = vmatpush1.bf16.msra.mxu0 0
        %1081 = vmatprep.subr.bf16.mxu0 0
        %1082 = vmatpush1.bf16.msra.mxu0 0
        %1083 = vmatprep.subr.bf16.mxu0 0
        %1084 = vmatpush1.bf16.msra.mxu0 0
        %1085 = vmatprep.subr.bf16.mxu0 0
        %1086 = vmatpush1.bf16.msra.mxu0 0
        %1087 = vmatprep.subr.bf16.mxu0 0
        %1088 = vmatpush1.bf16.msra.mxu0 0
        %1089 = vmatprep.subr.bf16.mxu0 0
        %1090 = vmatpush1.bf16.msra.mxu0 0
        %1091 = vmatprep.subr.bf16.mxu0 0
        %1092 = vmatpush1.bf16.msra.mxu0 0
        %1093 = vmatprep.subr.bf16.mxu0 0
        %1094 = vmatpush1.bf16.msra.mxu0 0
        %1095 = vmatprep.subr.bf16.mxu0 0
        %1096 = vmatpush1.bf16.msra.mxu0 0
        %1097 = vmatprep.subr.bf16.mxu0 0
        %1098 = vmatpush1.bf16.msra.mxu0 0
        %1099 = vmatprep.subr.bf16.mxu0 0
        %1100 = vmatpush1.bf16.msra.mxu0 0
        %1101 = vmatprep.subr.bf16.mxu0 0
        %1102 = vmatpush1.bf16.msra.mxu0 0
        %1103 = vmatprep.subr.bf16.mxu0 0
        %1104 = vmatpush1.bf16.msra.mxu0 0
        %1105 = vmatprep.subr.bf16.mxu0 0
        %1106 = vmatpush1.bf16.msra.mxu0 0
        %1107 = vmatprep.mubr.bf16.mxu0 0
        %1108 = vmatmul.mubr.bf16.gmra.mrb[0].mxu0 %v1073
        %v1109 = vpop.f32.mrb[0].mxu0
        %v1110 = vadd.f32 %v1057, %v1109
        %v1111 = vpop.f32.mrb[0].mxu0
        %v1112 = vpop.f32.mrb[0].mxu0
        %v1113 = vpop.f32.mrb[0].mxu0
        %1114 = vdwg.mxu0
        %1116 = vrot.lane.b32.xlu0 %v1110, 120
        %v1117 = vpop.permute.xlu0 %1116
        %1119 = vrot.lane.b32.xlu0 %v1110, 112
        %v1120 = vpop.permute.xlu0 %1119
        %1122 = vrot.lane.b32.xlu0 %v1110, 104
        %v1123 = vpop.permute.xlu0 %1122
        %v1125 = vcombine.low %v1110, %v1120
        %v1126 = vcombine.high %v1110, %v1120
        %v1128 = vunpack.c.l.s4 1983009808
        %v1129 = vunpack.c.0.s8 %v1128
        %v1130 = vlaneseq
        %v1131 = vshrl.u32 %v1130, 7
        %v1132 = vsub.s32 %v1129, %v1131
        %v1133 = vrot.slane %v1125, %v1132
        %v1135 = vunpack.c.l.s4 1983009808
        %v1136 = vunpack.c.0.s8 %v1135
        %v1137 = vlaneseq
        %v1138 = vshrl.u32 %v1137, 7
        %v1139 = vsub.s32 %v1136, %v1138
        %v1140 = vrot.slane %v1126, %v1139
        %v1141 = vcombine.low %v1117, %v1123
        %v1142 = vcombine.high %v1117, %v1123
        %v1144 = vunpack.c.l.s4 1983009808
        %v1145 = vunpack.c.0.s8 %v1144
        %v1146 = vlaneseq
        %v1147 = vshrl.u32 %v1146, 7
        %v1148 = vsub.s32 %v1145, %v1147
        %v1149 = vrot.slane %v1141, %v1148
        %v1151 = vunpack.c.l.s4 1983009808
        %v1152 = vunpack.c.0.s8 %v1151
        %v1153 = vlaneseq
        %v1154 = vshrl.u32 %v1153, 7
        %v1155 = vsub.s32 %v1152, %v1154
        %v1156 = vrot.slane %v1142, %v1155
        %v1157 = vcombine.low %v1133, %v1149
        %v1158 = vcombine.high %v1133, %v1149
        %v1160 = vunpack.c.l.s4 1934713408
        %v1161 = vunpack.c.0.s8 %v1160
        %v1162 = vlaneseq
        %v1163 = vshrl.u32 %v1162, 7
        %v1164 = vsub.s32 %v1161, %v1163
        %v1165 = vrot.slane %v1157, %v1164
        %v1167 = vunpack.c.l.s4 1934713408
        %v1168 = vunpack.c.0.s8 %v1167
        %v1169 = vlaneseq
        %v1170 = vshrl.u32 %v1169, 7
        %v1171 = vsub.s32 %v1168, %v1170
        %v1172 = vrot.slane %v1158, %v1171
        %v1173 = vcombine.low %v1140, %v1156
        %v1174 = vcombine.high %v1140, %v1156
        %v1176 = vunpack.c.l.s4 1934713408
        %v1177 = vunpack.c.0.s8 %v1176
        %v1178 = vlaneseq
        %v1179 = vshrl.u32 %v1178, 7
        %v1180 = vsub.s32 %v1177, %v1179
        %v1181 = vrot.slane %v1173, %v1180
        %v1183 = vunpack.c.l.s4 1934713408
        %v1184 = vunpack.c.0.s8 %v1183
        %v1185 = vlaneseq
        %v1186 = vshrl.u32 %v1185, 7
        %v1187 = vsub.s32 %v1184, %v1186
        %v1188 = vrot.slane %v1174, %v1187
        %v1189 = vcombine.high %v1165, 0.0
        %v1190 = vcombine.high %v1172, 0.0
        %v1191 = vcombine.high %v1181, 0.0
        %v1192 = vcombine.high %v1188, 0.0
        %v1193 = vcombine.low %v1165, %v1172
        %v1195 = vunpack.c.l.s4 1983009808
        %v1196 = vunpack.c.0.s8 %v1195
        %v1197 = vlaneseq
        %v1198 = vshrl.u32 %v1197, 7
        %v1199 = vsub.s32 %v1196, %v1198
        %v1200 = vrot.slane %v1193, %v1199
        %v1201 = vcombine.low %v1189, %v1190
        %v1203 = vunpack.c.l.s4 1983009808
        %v1204 = vunpack.c.0.s8 %v1203
        %v1205 = vlaneseq
        %v1206 = vshrl.u32 %v1205, 7
        %v1207 = vsub.s32 %v1204, %v1206
        %v1208 = vrot.slane %v1201, %v1207
        %v1209 = vcombine.low %v1181, %v1188
        %v1211 = vunpack.c.l.s4 1983009808
        %v1212 = vunpack.c.0.s8 %v1211
        %v1213 = vlaneseq
        %v1214 = vshrl.u32 %v1213, 7
        %v1215 = vsub.s32 %v1212, %v1214
        %v1216 = vrot.slane %v1209, %v1215
        %v1217 = vcombine.low %v1191, %v1192
        %v1219 = vunpack.c.l.s4 1983009808
        %v1220 = vunpack.c.0.s8 %v1219
        %v1221 = vlaneseq
        %v1222 = vshrl.u32 %v1221, 7
        %v1223 = vsub.s32 %v1220, %v1222
        %v1224 = vrot.slane %v1217, %v1223
        %v1225 = vcombine.low %v1200, %v1208
        %v1226 = vcombine.high %v1200, %v1208
        %v1228 = vunpack.c.l.s4 1934713408
        %v1229 = vunpack.c.0.s8 %v1228
        %v1230 = vlaneseq
        %v1231 = vshrl.u32 %v1230, 7
        %v1232 = vsub.s32 %v1229, %v1231
        %v1233 = vrot.slane %v1225, %v1232
        %v1235 = vunpack.c.l.s4 1934713408
        %v1236 = vunpack.c.0.s8 %v1235
        %v1237 = vlaneseq
        %v1238 = vshrl.u32 %v1237, 7
        %v1239 = vsub.s32 %v1236, %v1238
        %v1240 = vrot.slane %v1226, %v1239
        %v1241 = vcombine.low %v1216, %v1224
        %v1242 = vcombine.high %v1216, %v1224
        %v1244 = vunpack.c.l.s4 1934713408
        %v1245 = vunpack.c.0.s8 %v1244
        %v1246 = vlaneseq
        %v1247 = vshrl.u32 %v1246, 7
        %v1248 = vsub.s32 %v1245, %v1247
        %v1249 = vrot.slane %v1241, %v1248
        %v1251 = vunpack.c.l.s4 1934713408
        %v1252 = vunpack.c.0.s8 %v1251
        %v1253 = vlaneseq
        %v1254 = vshrl.u32 %v1253, 7
        %v1255 = vsub.s32 %v1252, %v1254
        %v1256 = vrot.slane %v1242, %v1255
        %v1257 = vcombine.low %v1233, %v1249
        %v1258 = vcombine.high %v1233, %v1249
        %v1259 = vcombine.low %v1240, %v1256
        %v1260 = vcombine.high %v1240, %v1256
        %v1261 = vpack.c.bf16 %v1257, %v1257
        %v1262 = vpack.c.bf16 %v1258, %v1258
        %v1263 = vpack.c.bf16 %v1259, %v1259
        %v1264 = vpack.c.bf16 %v1260, %v1260
        %v1265 = vld [vmem:[#allocation2] sm:$0xf]
        %v1266 = vld [vmem:[#allocation2 + $0x4] sm:$0xf]
        %v1267 = vld [vmem:[#allocation2 + $0x8] sm:$0xf]
        %v1268 = vld [vmem:[#allocation2 + $0xc] sm:$0xf]
        %vm1269 = vcmask 64512
        %v1271 = vsel %vm1269, %v1261, 0
        %v1274 = vsel %vm1269, %v1265, 0
        %1276 = vmatprep.subr.bf16.mxu0 0
        %1277 = vmatpush1.bf16.xpose.msra.mxu0 %v1274
        %1278 = vmatprep.subr.bf16.mxu0 0
        %1279 = vmatpush1.bf16.xpose.msra.mxu0 0
        %1280 = vmatprep.subr.bf16.mxu0 0
        %1281 = vmatpush1.bf16.xpose.msra.mxu0 0
        %1282 = vmatprep.subr.bf16.mxu0 0
        %1283 = vmatpush1.bf16.xpose.msra.mxu0 0
        %1284 = vmatprep.subr.bf16.mxu0 0
        %1285 = vmatpush1.bf16.xpose.msra.mxu0 0
        %1286 = vmatprep.subr.bf16.mxu0 0
        %1287 = vmatpush1.bf16.xpose.msra.mxu0 0
        %1288 = vmatprep.subr.bf16.mxu0 0
        %1289 = vmatpush1.bf16.xpose.msra.mxu0 0
        %1290 = vmatprep.subr.bf16.mxu0 0
        %1291 = vmatpush1.bf16.xpose.msra.mxu0 0
        %1292 = vmatprep.subr.bf16.mxu0 0
        %1293 = vmatpush1.bf16.xpose.msra.mxu0 0
        %1294 = vmatprep.subr.bf16.mxu0 0
        %1295 = vmatpush1.bf16.xpose.msra.mxu0 0
        %1296 = vmatprep.subr.bf16.mxu0 0
        %1297 = vmatpush1.bf16.xpose.msra.mxu0 0
        %1298 = vmatprep.subr.bf16.mxu0 0
        %1299 = vmatpush1.bf16.xpose.msra.mxu0 0
        %1300 = vmatprep.subr.bf16.mxu0 0
        %1301 = vmatpush1.bf16.xpose.msra.mxu0 0
        %1302 = vmatprep.subr.bf16.mxu0 0
        %1303 = vmatpush1.bf16.xpose.msra.mxu0 0
        %1304 = vmatprep.subr.bf16.mxu0 0
        %1305 = vmatpush1.bf16.xpose.msra.mxu0 0
        %1306 = vmatprep.subr.bf16.mxu0 0
        %1307 = vmatpush1.bf16.xpose.msra.mxu0 0
        %1308 = vmatprep.mubr.bf16.mxu0 0
        %1309 = vmatmul.mubr.bf16.gmra.mrb[0].mxu0 %v1271
        %v1310 = vpop.f32.mrb[0].mxu0
        %v1311 = vadd.f32 0.0, %v1310
        %v1312 = vpop.f32.mrb[0].mxu0
        %v1313 = vpop.f32.mrb[0].mxu0
        %v1314 = vpop.f32.mrb[0].mxu0
        %1315 = vdwg.mxu0
        %v1317 = vsel %vm1269, %v1262, 0
        %v1320 = vsel %vm1269, %v1266, 0
        %1322 = vmatprep.subr.bf16.mxu0 0
        %1323 = vmatpush1.bf16.xpose.msra.mxu0 %v1320
        %1324 = vmatprep.subr.bf16.mxu0 0
        %1325 = vmatpush1.bf16.xpose.msra.mxu0 0
        %1326 = vmatprep.subr.bf16.mxu0 0
        %1327 = vmatpush1.bf16.xpose.msra.mxu0 0
        %1328 = vmatprep.subr.bf16.mxu0 0
        %1329 = vmatpush1.bf16.xpose.msra.mxu0 0
        %1330 = vmatprep.subr.bf16.mxu0 0
        %1331 = vmatpush1.bf16.xpose.msra.mxu0 0
        %1332 = vmatprep.subr.bf16.mxu0 0
        %1333 = vmatpush1.bf16.xpose.msra.mxu0 0
        %1334 = vmatprep.subr.bf16.mxu0 0
        %1335 = vmatpush1.bf16.xpose.msra.mxu0 0
        %1336 = vmatprep.subr.bf16.mxu0 0
        %1337 = vmatpush1.bf16.xpose.msra.mxu0 0
        %1338 = vmatprep.subr.bf16.mxu0 0
        %1339 = vmatpush1.bf16.xpose.msra.mxu0 0
        %1340 = vmatprep.subr.bf16.mxu0 0
        %1341 = vmatpush1.bf16.xpose.msra.mxu0 0
        %1342 = vmatprep.subr.bf16.mxu0 0
        %1343 = vmatpush1.bf16.xpose.msra.mxu0 0
        %1344 = vmatprep.subr.bf16.mxu0 0
        %1345 = vmatpush1.bf16.xpose.msra.mxu0 0
        %1346 = vmatprep.subr.bf16.mxu0 0
        %1347 = vmatpush1.bf16.xpose.msra.mxu0 0
        %1348 = vmatprep.subr.bf16.mxu0 0
        %1349 = vmatpush1.bf16.xpose.msra.mxu0 0
        %1350 = vmatprep.subr.bf16.mxu0 0
        %1351 = vmatpush1.bf16.xpose.msra.mxu0 0
        %1352 = vmatprep.subr.bf16.mxu0 0
        %1353 = vmatpush1.bf16.xpose.msra.mxu0 0
        %1354 = vmatprep.mubr.bf16.mxu0 0
        %1355 = vmatmul.mubr.bf16.gmra.mrb[0].mxu0 %v1317
        %v1356 = vpop.f32.mrb[0].mxu0
        %v1357 = vadd.f32 0.0, %v1356
        %v1358 = vpop.f32.mrb[0].mxu0
        %v1359 = vpop.f32.mrb[0].mxu0
        %v1360 = vpop.f32.mrb[0].mxu0
        %1361 = vdwg.mxu0
        %v1363 = vsel %vm1269, %v1263, 0
        %v1366 = vsel %vm1269, %v1267, 0
        %1368 = vmatprep.subr.bf16.mxu0 0
        %1369 = vmatpush1.bf16.xpose.msra.mxu0 %v1366
        %1370 = vmatprep.subr.bf16.mxu0 0
        %1371 = vmatpush1.bf16.xpose.msra.mxu0 0
        %1372 = vmatprep.subr.bf16.mxu0 0
        %1373 = vmatpush1.bf16.xpose.msra.mxu0 0
        %1374 = vmatprep.subr.bf16.mxu0 0
        %1375 = vmatpush1.bf16.xpose.msra.mxu0 0
        %1376 = vmatprep.subr.bf16.mxu0 0
        %1377 = vmatpush1.bf16.xpose.msra.mxu0 0
        %1378 = vmatprep.subr.bf16.mxu0 0
        %1379 = vmatpush1.bf16.xpose.msra.mxu0 0
        %1380 = vmatprep.subr.bf16.mxu0 0
        %1381 = vmatpush1.bf16.xpose.msra.mxu0 0
        %1382 = vmatprep.subr.bf16.mxu0 0
        %1383 = vmatpush1.bf16.xpose.msra.mxu0 0
        %1384 = vmatprep.subr.bf16.mxu0 0
        %1385 = vmatpush1.bf16.xpose.msra.mxu0 0
        %1386 = vmatprep.subr.bf16.mxu0 0
        %1387 = vmatpush1.bf16.xpose.msra.mxu0 0
        %1388 = vmatprep.subr.bf16.mxu0 0
        %1389 = vmatpush1.bf16.xpose.msra.mxu0 0
        %1390 = vmatprep.subr.bf16.mxu0 0
        %1391 = vmatpush1.bf16.xpose.msra.mxu0 0
        %1392 = vmatprep.subr.bf16.mxu0 0
        %1393 = vmatpush1.bf16.xpose.msra.mxu0 0
        %1394 = vmatprep.subr.bf16.mxu0 0
        %1395 = vmatpush1.bf16.xpose.msra.mxu0 0
        %1396 = vmatprep.subr.bf16.mxu0 0
        %1397 = vmatpush1.bf16.xpose.msra.mxu0 0
        %1398 = vmatprep.subr.bf16.mxu0 0
        %1399 = vmatpush1.bf16.xpose.msra.mxu0 0
        %1400 = vmatprep.mubr.bf16.mxu0 0
        %1401 = vmatmul.mubr.bf16.gmra.mrb[0].mxu0 %v1363
        %v1402 = vpop.f32.mrb[0].mxu0
        %v1403 = vadd.f32 0.0, %v1402
        %v1404 = vpop.f32.mrb[0].mxu0
        %v1405 = vpop.f32.mrb[0].mxu0
        %v1406 = vpop.f32.mrb[0].mxu0
        %1407 = vdwg.mxu0
        %v1409 = vsel %vm1269, %v1264, 0
        %v1412 = vsel %vm1269, %v1268, 0
        %1414 = vmatprep.subr.bf16.mxu0 0
        %1415 = vmatpush1.bf16.xpose.msra.mxu0 %v1412
        %1416 = vmatprep.subr.bf16.mxu0 0
        %1417 = vmatpush1.bf16.xpose.msra.mxu0 0
        %1418 = vmatprep.subr.bf16.mxu0 0
        %1419 = vmatpush1.bf16.xpose.msra.mxu0 0
        %1420 = vmatprep.subr.bf16.mxu0 0
        %1421 = vmatpush1.bf16.xpose.msra.mxu0 0
        %1422 = vmatprep.subr.bf16.mxu0 0
        %1423 = vmatpush1.bf16.xpose.msra.mxu0 0
        %1424 = vmatprep.subr.bf16.mxu0 0
        %1425 = vmatpush1.bf16.xpose.msra.mxu0 0
        %1426 = vmatprep.subr.bf16.mxu0 0
        %1427 = vmatpush1.bf16.xpose.msra.mxu0 0
        %1428 = vmatprep.subr.bf16.mxu0 0
        %1429 = vmatpush1.bf16.xpose.msra.mxu0 0
        %1430 = vmatprep.subr.bf16.mxu0 0
        %1431 = vmatpush1.bf16.xpose.msra.mxu0 0
        %1432 = vmatprep.subr.bf16.mxu0 0
        %1433 = vmatpush1.bf16.xpose.msra.mxu0 0
        %1434 = vmatprep.subr.bf16.mxu0 0
        %1435 = vmatpush1.bf16.xpose.msra.mxu0 0
        %1436 = vmatprep.subr.bf16.mxu0 0
        %1437 = vmatpush1.bf16.xpose.msra.mxu0 0
        %1438 = vmatprep.subr.bf16.mxu0 0
        %1439 = vmatpush1.bf16.xpose.msra.mxu0 0
        %1440 = vmatprep.subr.bf16.mxu0 0
        %1441 = vmatpush1.bf16.xpose.msra.mxu0 0
        %1442 = vmatprep.subr.bf16.mxu0 0
        %1443 = vmatpush1.bf16.xpose.msra.mxu0 0
        %1444 = vmatprep.subr.bf16.mxu0 0
        %1445 = vmatpush1.bf16.xpose.msra.mxu0 0
        %1446 = vmatprep.mubr.bf16.mxu0 0
        %1447 = vmatmul.mubr.bf16.gmra.mrb[0].mxu0 %v1409
        %v1448 = vpop.f32.mrb[0].mxu0
        %v1449 = vadd.f32 0.0, %v1448
        %v1450 = vpop.f32.mrb[0].mxu0
        %v1451 = vpop.f32.mrb[0].mxu0
        %v1452 = vpop.f32.mrb[0].mxu0
        %1453 = vdwg.mxu0
        %v1454 = vmul.f32 %v1311, 0.35355338
        %v1455 = vmul.f32 %v1357, 0.35355338
        %v1456 = vmul.f32 %v1403, 0.35355338
        %v1457 = vmul.f32 %v1449, 0.35355338
        %v1458 = vsel %vm1269, %v1454, -inf
        %1459 = vmax.xlane.f32.xlu0 %v1458
        %v1460 = vpop.xlane.xlu0 %1459
        %v1461 = vsel %vm1269, %v1455, -inf
        %1462 = vmax.xlane.f32.xlu0 %v1461
        %v1463 = vpop.xlane.xlu0 %1462
        %v1464 = vsel %vm1269, %v1456, -inf
        %1465 = vmax.xlane.f32.xlu0 %v1464
        %v1466 = vpop.xlane.xlu0 %1465
        %v1467 = vsel %vm1269, %v1457, -inf
        %1468 = vmax.xlane.f32.xlu0 %v1467
        %v1469 = vpop.xlane.xlu0 %1468
        %v1470 = vsub.f32 %v1454, %v1460
        %v1471 = vsub.f32 %v1455, %v1463
        %v1472 = vsub.f32 %v1456, %v1466
        %v1473 = vsub.f32 %v1457, %v1469
        %v1474 = vmul.f32 %v1470, 1.442695
        %v1475 = vpow.pop %v1474
        %v1476 = vmul.f32 %v1471, 1.442695
        %v1477 = vpow.pop %v1476
        %v1478 = vmul.f32 %v1472, 1.442695
        %v1479 = vpow.pop %v1478
        %v1480 = vmul.f32 %v1473, 1.442695
        %v1481 = vpow.pop %v1480
        %v1482 = vsel %vm1269, %v1475, 0.0
        %1483 = vadd.xlane.f32.xlu0 %v1482
        %v1484 = vpop.xlane.xlu0 %1483
        %v1485 = vsel %vm1269, %v1477, 0.0
        %1486 = vadd.xlane.f32.xlu0 %v1485
        %v1487 = vpop.xlane.xlu0 %1486
        %v1488 = vsel %vm1269, %v1479, 0.0
        %1489 = vadd.xlane.f32.xlu0 %v1488
        %v1490 = vpop.xlane.xlu0 %1489
        %v1491 = vsel %vm1269, %v1481, 0.0
        %1492 = vadd.xlane.f32.xlu0 %v1491
        %v1493 = vpop.xlane.xlu0 %1492
        %v1494 = vrcp.pop %v1484
        %v1495 = vrcp.pop %v1487
        %v1496 = vrcp.pop %v1490
        %v1497 = vrcp.pop %v1493
        %v1498 = vmul.f32 %v1475, %v1494
        %v1499 = vmul.f32 %v1477, %v1495
        %v1500 = vmul.f32 %v1479, %v1496
        %v1501 = vmul.f32 %v1481, %v1497
        %v1502 = vpack.c.bf16 %v1498, %v1498
        %v1503 = vpack.c.bf16 %v1499, %v1499
        %v1504 = vpack.c.bf16 %v1500, %v1500
        %v1505 = vpack.c.bf16 %v1501, %v1501
        %v1506 = vld [vmem:[#allocation3] sm:$0xf]
        %v1507 = vld [vmem:[#allocation3 + $0x4] sm:$0xf]
        %v1508 = vld [vmem:[#allocation3 + $0x8] sm:$0xf]
        %v1509 = vld [vmem:[#allocation3 + $0xc] sm:$0xf]
        %v1511 = vsel %vm1269, %v1502, 0
        %vm1513 = vcmask 1043456
        %v1515 = vsel %vm1513, %v1506, 0
        %1517 = vmatprep.subr.bf16.mxu0 0
        %1518 = vmatpush1.bf16.msra.mxu0 %v1515
        %1519 = vmatprep.subr.bf16.mxu0 0
        %1520 = vmatpush1.bf16.msra.mxu0 0
        %1521 = vmatprep.subr.bf16.mxu0 0
        %1522 = vmatpush1.bf16.msra.mxu0 0
        %1523 = vmatprep.subr.bf16.mxu0 0
        %1524 = vmatpush1.bf16.msra.mxu0 0
        %1525 = vmatprep.subr.bf16.mxu0 0
        %1526 = vmatpush1.bf16.msra.mxu0 0
        %1527 = vmatprep.subr.bf16.mxu0 0
        %1528 = vmatpush1.bf16.msra.mxu0 0
        %1529 = vmatprep.subr.bf16.mxu0 0
        %1530 = vmatpush1.bf16.msra.mxu0 0
        %1531 = vmatprep.subr.bf16.mxu0 0
        %1532 = vmatpush1.bf16.msra.mxu0 0
        %1533 = vmatprep.subr.bf16.mxu0 0
        %1534 = vmatpush1.bf16.msra.mxu0 0
        %1535 = vmatprep.subr.bf16.mxu0 0
        %1536 = vmatpush1.bf16.msra.mxu0 0
        %1537 = vmatprep.subr.bf16.mxu0 0
        %1538 = vmatpush1.bf16.msra.mxu0 0
        %1539 = vmatprep.subr.bf16.mxu0 0
        %1540 = vmatpush1.bf16.msra.mxu0 0
        %1541 = vmatprep.subr.bf16.mxu0 0
        %1542 = vmatpush1.bf16.msra.mxu0 0
        %1543 = vmatprep.subr.bf16.mxu0 0
        %1544 = vmatpush1.bf16.msra.mxu0 0
        %1545 = vmatprep.subr.bf16.mxu0 0
        %1546 = vmatpush1.bf16.msra.mxu0 0
        %1547 = vmatprep.subr.bf16.mxu0 0
        %1548 = vmatpush1.bf16.msra.mxu0 0
        %1549 = vmatprep.mubr.bf16.mxu0 0
        %1550 = vmatmul.mubr.bf16.gmra.mrb[0].mxu0 %v1511
        %v1551 = vpop.f32.mrb[0].mxu0
        %v1552 = vadd.f32 0.0, %v1551
        %v1553 = vpop.f32.mrb[0].mxu0
        %v1554 = vpop.f32.mrb[0].mxu0
        %v1555 = vpop.f32.mrb[0].mxu0
        %1556 = vdwg.mxu0
        %v1558 = vsel %vm1269, %v1503, 0
        %v1561 = vsel %vm1513, %v1507, 0
        %1563 = vmatprep.subr.bf16.mxu0 0
        %1564 = vmatpush1.bf16.msra.mxu0 %v1561
        %1565 = vmatprep.subr.bf16.mxu0 0
        %1566 = vmatpush1.bf16.msra.mxu0 0
        %1567 = vmatprep.subr.bf16.mxu0 0
        %1568 = vmatpush1.bf16.msra.mxu0 0
        %1569 = vmatprep.subr.bf16.mxu0 0
        %1570 = vmatpush1.bf16.msra.mxu0 0
        %1571 = vmatprep.subr.bf16.mxu0 0
        %1572 = vmatpush1.bf16.msra.mxu0 0
        %1573 = vmatprep.subr.bf16.mxu0 0
        %1574 = vmatpush1.bf16.msra.mxu0 0
        %1575 = vmatprep.subr.bf16.mxu0 0
        %1576 = vmatpush1.bf16.msra.mxu0 0
        %1577 = vmatprep.subr.bf16.mxu0 0
        %1578 = vmatpush1.bf16.msra.mxu0 0
        %1579 = vmatprep.subr.bf16.mxu0 0
        %1580 = vmatpush1.bf16.msra.mxu0 0
        %1581 = vmatprep.subr.bf16.mxu0 0
        %1582 = vmatpush1.bf16.msra.mxu0 0
        %1583 = vmatprep.subr.bf16.mxu0 0
        %1584 = vmatpush1.bf16.msra.mxu0 0
        %1585 = vmatprep.subr.bf16.mxu0 0
        %1586 = vmatpush1.bf16.msra.mxu0 0
        %1587 = vmatprep.subr.bf16.mxu0 0
        %1588 = vmatpush1.bf16.msra.mxu0 0
        %1589 = vmatprep.subr.bf16.mxu0 0
        %1590 = vmatpush1.bf16.msra.mxu0 0
        %1591 = vmatprep.subr.bf16.mxu0 0
        %1592 = vmatpush1.bf16.msra.mxu0 0
        %1593 = vmatprep.subr.bf16.mxu0 0
        %1594 = vmatpush1.bf16.msra.mxu0 0
        %1595 = vmatprep.mubr.bf16.mxu0 0
        %1596 = vmatmul.mubr.bf16.gmra.mrb[0].mxu0 %v1558
        %v1597 = vpop.f32.mrb[0].mxu0
        %v1598 = vadd.f32 0.0, %v1597
        %v1599 = vpop.f32.mrb[0].mxu0
        %v1600 = vpop.f32.mrb[0].mxu0
        %v1601 = vpop.f32.mrb[0].mxu0
        %1602 = vdwg.mxu0
        %v1604 = vsel %vm1269, %v1504, 0
        %v1607 = vsel %vm1513, %v1508, 0
        %1609 = vmatprep.subr.bf16.mxu0 0
        %1610 = vmatpush1.bf16.msra.mxu0 %v1607
        %1611 = vmatprep.subr.bf16.mxu0 0
        %1612 = vmatpush1.bf16.msra.mxu0 0
        %1613 = vmatprep.subr.bf16.mxu0 0
        %1614 = vmatpush1.bf16.msra.mxu0 0
        %1615 = vmatprep.subr.bf16.mxu0 0
        %1616 = vmatpush1.bf16.msra.mxu0 0
        %1617 = vmatprep.subr.bf16.mxu0 0
        %1618 = vmatpush1.bf16.msra.mxu0 0
        %1619 = vmatprep.subr.bf16.mxu0 0
        %1620 = vmatpush1.bf16.msra.mxu0 0
        %1621 = vmatprep.subr.bf16.mxu0 0
        %1622 = vmatpush1.bf16.msra.mxu0 0
        %1623 = vmatprep.subr.bf16.mxu0 0
        %1624 = vmatpush1.bf16.msra.mxu0 0
        %1625 = vmatprep.subr.bf16.mxu0 0
        %1626 = vmatpush1.bf16.msra.mxu0 0
        %1627 = vmatprep.subr.bf16.mxu0 0
        %1628 = vmatpush1.bf16.msra.mxu0 0
        %1629 = vmatprep.subr.bf16.mxu0 0
        %1630 = vmatpush1.bf16.msra.mxu0 0
        %1631 = vmatprep.subr.bf16.mxu0 0
        %1632 = vmatpush1.bf16.msra.mxu0 0
        %1633 = vmatprep.subr.bf16.mxu0 0
        %1634 = vmatpush1.bf16.msra.mxu0 0
        %1635 = vmatprep.subr.bf16.mxu0 0
        %1636 = vmatpush1.bf16.msra.mxu0 0
        %1637 = vmatprep.subr.bf16.mxu0 0
        %1638 = vmatpush1.bf16.msra.mxu0 0
        %1639 = vmatprep.subr.bf16.mxu0 0
        %1640 = vmatpush1.bf16.msra.mxu0 0
        %1641 = vmatprep.mubr.bf16.mxu0 0
        %1642 = vmatmul.mubr.bf16.gmra.mrb[0].mxu0 %v1604
        %v1643 = vpop.f32.mrb[0].mxu0
        %v1644 = vadd.f32 0.0, %v1643
        %v1645 = vpop.f32.mrb[0].mxu0
        %v1646 = vpop.f32.mrb[0].mxu0
        %v1647 = vpop.f32.mrb[0].mxu0
        %1648 = vdwg.mxu0
        %v1650 = vsel %vm1269, %v1505, 0
        %v1653 = vsel %vm1513, %v1509, 0
        %1655 = vmatprep.subr.bf16.mxu0 0
        %1656 = vmatpush1.bf16.msra.mxu0 %v1653
        %1657 = vmatprep.subr.bf16.mxu0 0
        %1658 = vmatpush1.bf16.msra.mxu0 0
        %1659 = vmatprep.subr.bf16.mxu0 0
        %1660 = vmatpush1.bf16.msra.mxu0 0
        %1661 = vmatprep.subr.bf16.mxu0 0
        %1662 = vmatpush1.bf16.msra.mxu0 0
        %1663 = vmatprep.subr.bf16.mxu0 0
        %1664 = vmatpush1.bf16.msra.mxu0 0
        %1665 = vmatprep.subr.bf16.mxu0 0
        %1666 = vmatpush1.bf16.msra.mxu0 0
        %1667 = vmatprep.subr.bf16.mxu0 0
        %1668 = vmatpush1.bf16.msra.mxu0 0
        %1669 = vmatprep.subr.bf16.mxu0 0
        %1670 = vmatpush1.bf16.msra.mxu0 0
        %1671 = vmatprep.subr.bf16.mxu0 0
        %1672 = vmatpush1.bf16.msra.mxu0 0
        %1673 = vmatprep.subr.bf16.mxu0 0
        %1674 = vmatpush1.bf16.msra.mxu0 0
        %1675 = vmatprep.subr.bf16.mxu0 0
        %1676 = vmatpush1.bf16.msra.mxu0 0
        %1677 = vmatprep.subr.bf16.mxu0 0
        %1678 = vmatpush1.bf16.msra.mxu0 0
        %1679 = vmatprep.subr.bf16.mxu0 0
        %1680 = vmatpush1.bf16.msra.mxu0 0
        %1681 = vmatprep.subr.bf16.mxu0 0
        %1682 = vmatpush1.bf16.msra.mxu0 0
        %1683 = vmatprep.subr.bf16.mxu0 0
        %1684 = vmatpush1.bf16.msra.mxu0 0
        %1685 = vmatprep.subr.bf16.mxu0 0
        %1686 = vmatpush1.bf16.msra.mxu0 0
        %1687 = vmatprep.mubr.bf16.mxu0 0
        %1688 = vmatmul.mubr.bf16.gmra.mrb[0].mxu0 %v1650
        %v1689 = vpop.f32.mrb[0].mxu0
        %v1690 = vadd.f32 0.0, %v1689
        %v1691 = vpop.f32.mrb[0].mxu0
        %v1692 = vpop.f32.mrb[0].mxu0
        %v1693 = vpop.f32.mrb[0].mxu0
        %1694 = vdwg.mxu0
        %v1695 = vcombine.low %v1552, %v1644
        %v1696 = vcombine.high %v1552, %v1644
        %v1698 = vunpack.c.l.s4 1983009808
        %v1699 = vunpack.c.0.s8 %v1698
        %v1700 = vlaneseq
        %v1701 = vshrl.u32 %v1700, 7
        %v1702 = vsub.s32 %v1699, %v1701
        %v1703 = vrot.slane %v1695, %v1702
        %v1705 = vunpack.c.l.s4 1983009808
        %v1706 = vunpack.c.0.s8 %v1705
        %v1707 = vlaneseq
        %v1708 = vshrl.u32 %v1707, 7
        %v1709 = vsub.s32 %v1706, %v1708
        %v1710 = vrot.slane %v1696, %v1709
        %v1711 = vcombine.low %v1598, %v1690
        %v1712 = vcombine.high %v1598, %v1690
        %v1714 = vunpack.c.l.s4 1983009808
        %v1715 = vunpack.c.0.s8 %v1714
        %v1716 = vlaneseq
        %v1717 = vshrl.u32 %v1716, 7
        %v1718 = vsub.s32 %v1715, %v1717
        %v1719 = vrot.slane %v1711, %v1718
        %v1721 = vunpack.c.l.s4 1983009808
        %v1722 = vunpack.c.0.s8 %v1721
        %v1723 = vlaneseq
        %v1724 = vshrl.u32 %v1723, 7
        %v1725 = vsub.s32 %v1722, %v1724
        %v1726 = vrot.slane %v1712, %v1725
        %v1727 = vcombine.low %v1703, %v1719
        %v1728 = vcombine.high %v1703, %v1719
        %v1730 = vunpack.c.l.s4 1934713408
        %v1731 = vunpack.c.0.s8 %v1730
        %v1732 = vlaneseq
        %v1733 = vshrl.u32 %v1732, 7
        %v1734 = vsub.s32 %v1731, %v1733
        %v1735 = vrot.slane %v1727, %v1734
        %v1737 = vunpack.c.l.s4 1934713408
        %v1738 = vunpack.c.0.s8 %v1737
        %v1739 = vlaneseq
        %v1740 = vshrl.u32 %v1739, 7
        %v1741 = vsub.s32 %v1738, %v1740
        %v1742 = vrot.slane %v1728, %v1741
        %v1743 = vcombine.low %v1710, %v1726
        %v1744 = vcombine.high %v1710, %v1726
        %v1746 = vunpack.c.l.s4 1934713408
        %v1747 = vunpack.c.0.s8 %v1746
        %v1748 = vlaneseq
        %v1749 = vshrl.u32 %v1748, 7
        %v1750 = vsub.s32 %v1747, %v1749
        %v1751 = vrot.slane %v1743, %v1750
        %v1753 = vunpack.c.l.s4 1934713408
        %v1754 = vunpack.c.0.s8 %v1753
        %v1755 = vlaneseq
        %v1756 = vshrl.u32 %v1755, 7
        %v1757 = vsub.s32 %v1754, %v1756
        %v1758 = vrot.slane %v1744, %v1757
        %v1759 = vcombine.high %v1735, 0.0
        %v1760 = vcombine.high %v1742, 0.0
        %v1761 = vcombine.high %v1751, 0.0
        %v1762 = vcombine.high %v1758, 0.0
        %v1763 = vcombine.low %v1735, %v1742
        %v1765 = vunpack.c.l.s4 1983009808
        %v1766 = vunpack.c.0.s8 %v1765
        %v1767 = vlaneseq
        %v1768 = vshrl.u32 %v1767, 7
        %v1769 = vsub.s32 %v1766, %v1768
        %v1770 = vrot.slane %v1763, %v1769
        %v1771 = vcombine.low %v1759, %v1760
        %v1773 = vunpack.c.l.s4 1983009808
        %v1774 = vunpack.c.0.s8 %v1773
        %v1775 = vlaneseq
        %v1776 = vshrl.u32 %v1775, 7
        %v1777 = vsub.s32 %v1774, %v1776
        %v1778 = vrot.slane %v1771, %v1777
        %v1779 = vcombine.low %v1751, %v1758
        %v1781 = vunpack.c.l.s4 1983009808
        %v1782 = vunpack.c.0.s8 %v1781
        %v1783 = vlaneseq
        %v1784 = vshrl.u32 %v1783, 7
        %v1785 = vsub.s32 %v1782, %v1784
        %v1786 = vrot.slane %v1779, %v1785
        %v1787 = vcombine.low %v1761, %v1762
        %v1789 = vunpack.c.l.s4 1983009808
        %v1790 = vunpack.c.0.s8 %v1789
        %v1791 = vlaneseq
        %v1792 = vshrl.u32 %v1791, 7
        %v1793 = vsub.s32 %v1790, %v1792
        %v1794 = vrot.slane %v1787, %v1793
        %v1795 = vcombine.low %v1770, %v1778
        %v1796 = vcombine.high %v1770, %v1778
        %v1798 = vunpack.c.l.s4 1934713408
        %v1799 = vunpack.c.0.s8 %v1798
        %v1800 = vlaneseq
        %v1801 = vshrl.u32 %v1800, 7
        %v1802 = vsub.s32 %v1799, %v1801
        %v1803 = vrot.slane %v1795, %v1802
        %v1805 = vunpack.c.l.s4 1934713408
        %v1806 = vunpack.c.0.s8 %v1805
        %v1807 = vlaneseq
        %v1808 = vshrl.u32 %v1807, 7
        %v1809 = vsub.s32 %v1806, %v1808
        %v1810 = vrot.slane %v1796, %v1809
        %v1811 = vcombine.low %v1786, %v1794
        %v1812 = vcombine.high %v1786, %v1794
        %v1814 = vunpack.c.l.s4 1934713408
        %v1815 = vunpack.c.0.s8 %v1814
        %v1816 = vlaneseq
        %v1817 = vshrl.u32 %v1816, 7
        %v1818 = vsub.s32 %v1815, %v1817
        %v1819 = vrot.slane %v1811, %v1818
        %v1821 = vunpack.c.l.s4 1934713408
        %v1822 = vunpack.c.0.s8 %v1821
        %v1823 = vlaneseq
        %v1824 = vshrl.u32 %v1823, 7
        %v1825 = vsub.s32 %v1822, %v1824
        %v1826 = vrot.slane %v1812, %v1825
        %v1827 = vcombine.low %v1803, %v1819
        %v1828 = vcombine.high %v1803, %v1819
        %v1829 = vcombine.low %v1810, %v1826
        %v1830 = vcombine.high %v1810, %v1826
        %1832 = vrot.lane.b32.xlu0 %v1828, 8
        %v1833 = vpop.permute.xlu0 %1832
        %1836 = vrot.lane.b32.xlu0 %v1829, 16
        %v1837 = vpop.permute.xlu0 %1836
        %1840 = vrot.lane.b32.xlu0 %v1830, 24
        %v1841 = vpop.permute.xlu0 %1840
        %v1843 = vsel %vm1269, %v1827, %v1833
        %vm1844 = vcmask 130048
        %v1845 = vsel %vm1844, %v1843, %v1837
        %vm1846 = vcmask 195584
        %v1847 = vsel %vm1846, %v1845, %v1841
        %v1848 = vpack.c.bf16 %v1847, %v1847
        %v1849 = vld [vmem:[#allocation15] sm:$0xf]
        %v1850 = vld [vmem:[#allocation15 + $0x4] sm:$0xf]
        %v1851 = vld [vmem:[#allocation15 + $0x8] sm:$0xf]
        %v1852 = vld [vmem:[#allocation15 + $0xc] sm:$0xf]
        %v1853 = vld [vmem:[#allocation21] sm:$0x1]
        %v1855 = vlaneseq
        %v1856 = vshrl.u32 %v1855, 7
        %v1857 = vsub.s32 0, %v1856
        %v1858 = vrot.slane %v1853, %v1857
        %v1864 = vunpack.c.l.b16 %v1849
        %v1865 = vunpack.c.l.b16 %v1850
        %v1866 = vunpack.c.l.b16 %v1851
        %v1867 = vunpack.c.l.b16 %v1852
        %v1868 = vpack.c.b16 %v1865, %v1864
        %v1869 = vpack.c.b16 %v1867, %v1866
        %v1873 = vsel %vm1071, %v1848, 0
        %1875 = vmatprep.subr.bf16.mxu0 0
        %1876 = vmatpush1.bf16.msra.mxu0 %v1868
        %1877 = vmatprep.subr.bf16.mxu0 0
        %1878 = vmatpush1.bf16.msra.mxu0 %v1869
        %1879 = vmatprep.subr.bf16.mxu0 0
        %1880 = vmatpush1.bf16.msra.mxu0 0
        %1881 = vmatprep.subr.bf16.mxu0 0
        %1882 = vmatpush1.bf16.msra.mxu0 0
        %1883 = vmatprep.subr.bf16.mxu0 0
        %1884 = vmatpush1.bf16.msra.mxu0 0
        %1885 = vmatprep.subr.bf16.mxu0 0
        %1886 = vmatpush1.bf16.msra.mxu0 0
        %1887 = vmatprep.subr.bf16.mxu0 0
        %1888 = vmatpush1.bf16.msra.mxu0 0
        %1889 = vmatprep.subr.bf16.mxu0 0
        %1890 = vmatpush1.bf16.msra.mxu0 0
        %1891 = vmatprep.subr.bf16.mxu0 0
        %1892 = vmatpush1.bf16.msra.mxu0 0
        %1893 = vmatprep.subr.bf16.mxu0 0
        %1894 = vmatpush1.bf16.msra.mxu0 0
        %1895 = vmatprep.subr.bf16.mxu0 0
        %1896 = vmatpush1.bf16.msra.mxu0 0
        %1897 = vmatprep.subr.bf16.mxu0 0
        %1898 = vmatpush1.bf16.msra.mxu0 0
        %1899 = vmatprep.subr.bf16.mxu0 0
        %1900 = vmatpush1.bf16.msra.mxu0 0
        %1901 = vmatprep.subr.bf16.mxu0 0
        %1902 = vmatpush1.bf16.msra.mxu0 0
        %1903 = vmatprep.subr.bf16.mxu0 0
        %1904 = vmatpush1.bf16.msra.mxu0 0
        %1905 = vmatprep.subr.bf16.mxu0 0
        %1906 = vmatpush1.bf16.msra.mxu0 0
        %1907 = vmatprep.mubr.bf16.mxu0 0
        %1908 = vmatmul.mubr.bf16.gmra.mrb[0].mxu0 %v1873
        %v1909 = vpop.f32.mrb[0].mxu0
        %v1910 = vadd.f32 %v1858, %v1909
        %v1911 = vpop.f32.mrb[0].mxu0
        %v1912 = vpop.f32.mrb[0].mxu0
        %v1913 = vpop.f32.mrb[0].mxu0
        %1914 = vdwg.mxu0
        %1915 = vst.msk [vmem:[%s597] sm:$0xff] %vm1071, %v1910
        %s1916 = sand.u32 %s305, 1
        %s1917 = scalar_lea.sflag [#allocation6], %s1916
        %s1918 = sand.u32 %s305, 1
        %s1919 = smul.addr %s1918, 8
        %s1920 = scalar_lea.vmem [#allocation22], %s1919
        // Predicated region
        $region113: #{tpu_custom_call.1} parent=63 // pred_check
          %p1921 = pneg %p315
        $region114: #{tpu_custom_call.1} parent=63 // pred_check_branch
          %1923 = sbr.rel (%p1921) target = $region116
        $region115: #{tpu_custom_call.1} parent=63 // pred_region
          %s1925 = ssub.s32 128, 128
          %1926 = vsyncadd %s1917, %s1925
          %s1927 = sadd.s32 %s40, %s39
          %s1928 = smul.addr %s1927, 128
          %s1929 = scalar_lea.hbm %s11, %s1928
          %s1931 = sshll.u32 %s1920, 4
          %s1932 = int_to_ptr.vmem [resolvable:$true] %s1931
          %1934 = dma.vmem_to_hbm [thread:$0]  %s1932, 128, %s1929, %s1917
        $region116: #{tpu_custom_call.1} parent=63 // pred_fallthru
          _
      $region64: #{tpu_custom_call.1} parent=5 // pred_fallthru
        _
      %p1935 = scmp.le.s32.totalorder 2, %s30
      // Predicated region
      $region117: #{tpu_custom_call.1} parent=5 // pred_check
        %p1936 = pneg %p1935
      $region118: #{tpu_custom_call.1} parent=5 // pred_check_branch
        %1938 = sbr.rel (%p1936) target = $region120
      $region119: #{tpu_custom_call.1} parent=5 // pred_region
        %s1939 = ssub.s32 %s30, 2
        // Predicated region
        $region121: #{tpu_custom_call.1} parent=119 // pred_check
          %p1940 = pneg %p321
        $region122: #{tpu_custom_call.1} parent=119 // pred_check_branch
          %1942 = sbr.rel (%p1940) target = $region124
        $region123: #{tpu_custom_call.1} parent=119 // pred_region
          %s1943 = sand.u32 %s306, 1
          %s1944 = scalar_lea.sflag [#allocation6], %s1943
          %s1945 = sand.u32 %s306, 1
          %s1946 = smul.addr %s1945, 8
          %s1947 = scalar_lea.vmem [#allocation22], %s1946
          %1948 = dma.done %s1944, 128
        $region124: #{tpu_custom_call.1} parent=119 // pred_fallthru
          _
      $region120: #{tpu_custom_call.1} parent=5 // pred_fallthru
        _
    $region6: #{tpu_custom_call.1} parent=1 // loop_footer
      %s34 = sadd.s32 1, %s30
    $region7: #{tpu_custom_call.1} parent=1 // loop_footer_branch
      %29 = sbr.rel target = $region3
    $region8: #{tpu_custom_call.1} parent=1 // loop_exit
      _
    %1949 = vsyncpa [#allocation5], 1
    %s1950 = scalar_lea.sflag [#allocation5], 1
    %1951 = vsyncpa %s1950, 1
    %1952 = vsyncpa [#allocation8], 1
    %s1953 = scalar_lea.sflag [#allocation8], 1
    %1954 = vsyncpa %s1953, 1
    %1955 = vsyncpa [#allocation11], 1
    %1956 = vsyncpa [#allocation14], 1
    %1957 = vsyncpa [#allocation17], 1
    %1958 = vsyncpa [#allocation20], 1
    %1959 = vsyncpa [#allocation6], 1
    %s1960 = scalar_lea.sflag [#allocation6], 1
    %1961 = vsyncpa %s1960, 1

</llo_original>
